<compile_context>
chip_gen: v5e
topology: v5e:2x2
jax: 0.10.0
libtpu: 0.0.40
codegen_flags: <defaults>
</compile_context>

<pallas_src>
import functools

import jax
import jax.numpy as jnp
from jax import lax
from jax.experimental import pallas as pl
from jax.experimental.pallas import tpu as pltpu

NEG_INF = -1e30
LANE = 128
TM_MAX = 256   # dst-row tile (TODO(synk): drop to 128 on v7x for very large graphs)


def _round_up(x, m):
    return ((x + m - 1) // m) * m


def _pad_to(a, shape):
    out = jnp.zeros(shape, a.dtype)
    return out.at[tuple(slice(0, s) for s in a.shape)].set(a)


def _softmax_dtype():
    # bf16 VALU/EUP exists on v6e/v7x; keep the e/softmax path in f32 on v5e & older.
    try:
        kind = jax.devices()[0].device_kind.lower()
    except Exception:
        return jnp.float32
    if any(v in kind for v in ("v2", "v3", "v4", "v5")):
        return jnp.float32
    return jnp.bfloat16


def fused_gat_kernel(x_hbm_ref, w_ref, avec_ref, bias_ref, mask_ref, out_ref,
                     act_ref, h_ref, asrc_ref, *,
                     tm, col_att, mask_resident, sm_dtype, negative_slope=0.2):
    l = pl.program_id(0)          # layer index (sequential)
    t = pl.program_id(1)          # destination-node tile index
    num_layers = pl.num_programs(0)

    # Once per layer (first dst tile): project ALL nodes with this layer's weights.
    @pl.when(t == 0)
    def _():
        # One-shot DMA of the input features into the resident activation buffer.
        @pl.when(l == 0)
        def _():
            pltpu.sync_copy(x_hbm_ref, act_ref)
        x_full = act_ref[...]                                        # [Np, Fp] bf16
        # W_ext carries att_dst @ W^T as column `col_att`, so this single matmul
        # yields h (real output columns) and the dst attention logits (col_att).
        h_ref[...] = jnp.dot(x_full, w_ref[0],
                             preferred_element_type=jnp.float32
                             ).astype(jnp.bfloat16)                  # [Np, Fp]
        # a_src as a row over source nodes (lane axis) -> directly broadcastable.
        asrc_ref[...] = lax.dot_general(
            avec_ref[0], x_full, (((1,), (1,)), ((), ())),
            preferred_element_type=jnp.float32).astype(sm_dtype)     # [1, Np]

    row0 = pl.multiple_of(t * tm, tm)
    a_dst = h_ref[pl.ds(row0, tm), pl.ds(col_att, 1)].astype(sm_dtype)   # [TM, 1]
    e = a_dst + asrc_ref[...]                                        # [TM, Np]
    e = jnp.maximum(e, negative_slope * e)                           # LeakyReLU(0.2)
    if mask_resident:
        e = e + mask_ref[pl.ds(row0, tm), :]                         # additive -1e30 mask
    else:
        e = e + mask_ref[...]

    m = jnp.max(e, axis=-1, keepdims=True)
    p = jnp.exp(e - m)                                               # masked entries -> 0
    denom = jnp.sum(p, axis=-1, keepdims=True, dtype=jnp.float32)    # >= 1 (self loops)

    out_un = jnp.dot(p.astype(jnp.bfloat16), h_ref[...],
                     preferred_element_type=jnp.float32)             # [TM, Fp] f32
    inv = pl.reciprocal(denom, approx=True)                          # EUP slot
    out = out_un * inv + bias_ref[0]                                 # [TM, Fp] f32

    # Hidden-layer activation (ReLU) fed to the next layer; dead on the last layer.
    @pl.when(l < num_layers - 1)
    def _():
        act_ref[pl.ds(row0, tm), :] = jnp.maximum(out, 0.0).astype(act_ref.dtype)

    # Final output stays resident; HBM writeback happens once, after the grid ends.
    @pl.when(l == num_layers - 1)
    def _():
        out_ref[pl.ds(row0, tm), :] = out


def denoising_autoencoder_forward(x, edge_index, params):
    n, feature_dim = x.shape
    num_layers = len(params)
    sm_dtype = _softmax_dtype()
    sm_bytes = jnp.dtype(sm_dtype).itemsize

    # Common padded feature width (lane-dense) with one spare column for the folded
    # att_dst projection.
    # TODO(synk): heterogeneous layer widths all pay f_pad^2 weight DMA / MXU work;
    # per-layer padded widths would avoid that if dims diverge strongly.
    f_real = max([feature_dim] + [d for p in params for d in p["w"].shape])
    f_pad = _round_up(f_real, LANE)
    if f_real == f_pad:
        # TODO(synk): when the widest layer is an exact multiple of 128, a separate
        # a_dst GEMV would avoid paying an extra 128 lanes for the folded column.
        f_pad += LANE
    col_att = f_pad - 1

    # Destination-node tiling; node (source) axis padded to a lane multiple (128).
    n_pad = _round_up(max(n, 1), LANE)
    if n_pad <= TM_MAX:
        tm = n_pad
    else:
        tm = TM_MAX
        n_pad = _round_up(n_pad, tm)
    n_tiles = n_pad // tm

    # ---- host-side glue (plain JAX): parameter packing + dense additive mask ----
    w_list, avec_list, bias_list = [], [], []
    for p in params:
        w = p["w"].astype(jnp.float32)                       # [Fi, Fo]
        fi, fo = w.shape
        w_ext = jnp.zeros((f_pad, f_pad), jnp.float32)
        w_ext = w_ext.at[:fi, :fo].set(w)
        # Fold att_dst @ W^T as one extra weight column -> a_dst = h_ext[:, col_att].
        w_ext = w_ext.at[:fi, col_att].set((p["att_dst"].astype(jnp.float32) @ w.T)[0])
        w_list.append(w_ext)
        avec_list.append(_pad_to(p["att_src"].astype(jnp.float32) @ w.T, (1, f_pad)))
        bias_list.append(_pad_to(p["bias"].astype(jnp.float32), (1, f_pad)))
    w_stack = jnp.stack(w_list).astype(jnp.bfloat16)         # [L, Fp, Fp]
    avec_stack = jnp.stack(avec_list).astype(jnp.bfloat16)   # [L, 1, Fp]
    bias_stack = jnp.stack(bias_list)                        # [L, 1, Fp] f32

    # edge_index[0] = source, edge_index[1] = target; self loops also on padded rows
    # so every softmax row has one finite entry.
    # TODO(synk): duplicate (multi-)edges collapse to one entry in the dense mask.
    src, dst = edge_index[0], edge_index[1]
    adj = jnp.zeros((n_pad, n_pad), jnp.float32).at[dst, src].set(1.0)
    adj = jnp.maximum(adj, jnp.eye(n_pad, dtype=jnp.float32))
    mask_bias = jnp.where(adj > 0.0, 0.0, NEG_INF).astype(sm_dtype)

    x_pad = _pad_to(x.astype(jnp.float32), (n_pad, f_pad)).astype(jnp.bfloat16)

    # Mask stays VMEM-resident (single HBM read) when it fits; otherwise stream tiles.
    mask_resident = n_pad * n_pad * sm_bytes <= (16 << 20)
    mask_spec = (pl.BlockSpec((n_pad, n_pad), lambda l, t: (0, 0)) if mask_resident
                 else pl.BlockSpec((tm, n_pad), lambda l, t: (t, 0)))
    # TODO(synk): for graphs whose mask/h no longer fit VMEM (esp. v7x 64 MiB), add a
    # source-axis tile with flash-style online softmax instead of streaming [tm, n_pad].

    mask_vmem = (n_pad * n_pad if mask_resident else 2 * tm * n_pad) * sm_bytes
    vmem_est = (2 * n_pad * f_pad * 2            # act + h scratch (bf16)
                + 2 * n_pad * f_pad * 4          # resident output block
                + mask_vmem
                + 2 * f_pad * f_pad * 2          # double-buffered weights
                + 8 * tm * n_pad * sm_bytes      # softmax temporaries headroom
                + (4 << 20))
    vmem_limit = int(min(max(vmem_est, 32 << 20), 56 << 20))   # <= 56 MiB: safe on v7x

    kernel = functools.partial(
        fused_gat_kernel, tm=tm, col_att=col_att,
        mask_resident=mask_resident, sm_dtype=sm_dtype, negative_slope=0.2)

    out_pad = pl.pallas_call(
        kernel,
        out_shape=jax.ShapeDtypeStruct((n_pad, f_pad), jnp.float32),
        grid_spec=pltpu.PrefetchScalarGridSpec(
            num_scalar_prefetch=0,
            grid=(num_layers, n_tiles),
            in_specs=[
                pl.BlockSpec(memory_space=pl.ANY),                        # x: one DMA
                pl.BlockSpec((1, f_pad, f_pad), lambda l, t: (l, 0, 0)),  # W_ext / layer
                pl.BlockSpec((1, 1, f_pad), lambda l, t: (l, 0, 0)),      # att_src @ W^T
                pl.BlockSpec((1, 1, f_pad), lambda l, t: (l, 0, 0)),      # bias
                mask_spec,                                                # adjacency mask
            ],
            out_specs=pl.BlockSpec((n_pad, f_pad), lambda l, t: (0, 0)),  # resident out
            scratch_shapes=[
                pltpu.VMEM((n_pad, f_pad), jnp.bfloat16),  # activations (persist / layers)
                pltpu.VMEM((n_pad, f_pad), jnp.bfloat16),  # h_ext for current layer
                pltpu.VMEM((1, n_pad), sm_dtype),          # a_src row
            ]),
        # TODO(synk): the layer axis and the t==0 projection force both grid axes to be
        # sequential; a v7x dual-TensorCore split of the dst-tile axis needs a restructure.
        compiler_params=pltpu.CompilerParams(
            dimension_semantics=("arbitrary", "arbitrary"),
            vmem_limit_bytes=vmem_limit),
    )(x_pad, w_stack, avec_stack, bias_stack, mask_bias)

    return out_pad[:n, :feature_dim]


def init_params(key, feature_dim, hidden_dim):
    """GATConv params per layer: W [Fin,Fout], att_src/att_dst [1,Fout], bias [1,Fout]."""
    dims = [feature_dim] + list(hidden_dim) + [feature_dim]
    params = []
    for i in range(len(dims) - 1):
        key, k1, k2, k3 = jax.random.split(key, 4)
        fi, fo = dims[i], dims[i + 1]
        params.append(dict(
            w=jax.random.normal(k1, (fi, fo), jnp.float32) / jnp.sqrt(float(fi)),
            att_src=0.1 * jax.random.normal(k2, (1, fo), jnp.float32),
            att_dst=0.1 * jax.random.normal(k3, (1, fo), jnp.float32),
            bias=jnp.zeros((1, fo), jnp.float32),
        ))
    return params


if __name__ == "__main__":
    N = 16            # number of graph nodes
    FEATURE_DIM = 16
    HIDDEN_DIM = (32,)

    key = jax.random.PRNGKey(0)
    key, kx = jax.random.split(key)
    x = jax.random.normal(kx, (N, FEATURE_DIM), jnp.float32)

    # deterministic ring graph, both directions: 2*N edges
    src = jnp.concatenate([jnp.arange(N), (jnp.arange(N) + 1) % N])
    dst = jnp.concatenate([(jnp.arange(N) + 1) % N, jnp.arange(N)])
    edge_index = jnp.stack([src, dst]).astype(jnp.int32)   # [2, 32]

    params = init_params(key, FEATURE_DIM, HIDDEN_DIM)

    out = denoising_autoencoder_forward(x, edge_index, params)
    jax.block_until_ready(out)
    assert out.shape == (N, FEATURE_DIM), out.shape
    print("KERNEL_OK")
</pallas_src>

<mosaic_0001>
module attributes {stable_mosaic.version = 11 : i64} {
  func.func @fused_gat_kernel(%arg0: i32, %arg1: i32, %arg2: memref<128x128xbf16, #tpu.memory_space<any>>, %arg3: memref<1x128x128xbf16, #tpu.memory_space<vmem>>, %arg4: memref<1x1x128xbf16, #tpu.memory_space<vmem>>, %arg5: memref<1x1x128xf32, #tpu.memory_space<vmem>>, %arg6: memref<128x128xbf16, #tpu.memory_space<vmem>>, %arg7: memref<128x128xf32, #tpu.memory_space<vmem>>, %arg8: memref<128x128xbf16, #tpu.memory_space<vmem>>, %arg9: memref<128x128xbf16, #tpu.memory_space<vmem>>, %arg10: memref<1x128xbf16, #tpu.memory_space<vmem>>) attributes {dimension_semantics = [#tpu.dimension_semantics<arbitrary>, #tpu.dimension_semantics<arbitrary>], iteration_bounds = array<i64: 2, 1>, scalar_prefetch = 0 : i64, scratch_operands = 3 : i64, tpu.core_type = #tpu.core_type<tc>, window_params = [{}, {transform_indices = @transform_1, window_bounds = array<i64: 1, 128, 128>}, {transform_indices = @transform_2, window_bounds = array<i64: 1, 1, 128>}, {transform_indices = @transform_3, window_bounds = array<i64: 1, 1, 128>}, {pipeline_mode = #tpu.pipeline_mode<synchronous>, transform_indices = @transform_4, window_bounds = array<i64: 128, 128>}, {pipeline_mode = #tpu.pipeline_mode<synchronous>, transform_indices = @transform_5, window_bounds = array<i64: 128, 128>}]} {
    %c0_i32 = arith.constant 0 : i32
    %0 = arith.cmpi eq, %arg1, %c0_i32 : i32
    %1 = arith.extui %0 : i1 to i32
    %c0_i32_0 = arith.constant 0 : i32
    %2 = arith.cmpi ne, %1, %c0_i32_0 : i32
    scf.if %2 {
      %c0_i32_14 = arith.constant 0 : i32
      %40 = arith.cmpi eq, %arg0, %c0_i32_14 : i32
      %41 = arith.extui %40 : i1 to i32
      %c0_i32_15 = arith.constant 0 : i32
      %42 = arith.cmpi ne, %41, %c0_i32_15 : i32
      scf.if %42 {
        "tpu.region"() ({
          %54 = tpu.sem_alloc : memref<!tpu.dma_semaphore, #tpu.memory_space<semaphore_mem>>
          tpu.enqueue_dma source(%arg2 : memref<128x128xbf16, #tpu.memory_space<any>>) target(%arg8 : memref<128x128xbf16, #tpu.memory_space<vmem>>) target_semaphore(%54 : memref<!tpu.dma_semaphore, #tpu.memory_space<semaphore_mem>>)
          tpu.wait_dma2 semaphore(%54 : memref<!tpu.dma_semaphore, #tpu.memory_space<semaphore_mem>>) src(%arg2 : memref<128x128xbf16, #tpu.memory_space<any>>) dst(%arg8 : memref<128x128xbf16, #tpu.memory_space<vmem>>)
          tpu.yield
        }) : () -> ()
      } else {
      }
      %c0_16 = arith.constant 0 : index
      %c0_17 = arith.constant 0 : index
      %43 = vector.load %arg8[%c0_16, %c0_17] : memref<128x128xbf16, #tpu.memory_space<vmem>>, vector<128x128xbf16>
      %c0_18 = arith.constant 0 : index
      %c0_19 = arith.constant 0 : index
      %c0_20 = arith.constant 0 : index
      %44 = vector.load %arg3[%c0_18, %c0_19, %c0_20] : memref<1x128x128xbf16, #tpu.memory_space<vmem>>, vector<1x128x128xbf16>
      %45 = vector.shape_cast %44 : vector<1x128x128xbf16> to vector<128x128xbf16>
      %cst_21 = arith.constant dense<0.000000e+00> : vector<128x128xf32>
      %46 = tpu.matmul %43, %45, %cst_21 {dimension_numbers = #tpu.dot_dimension_numbers<[1], [0], [0], [1], [0, 0, 1, 1], [], []>} : vector<128x128xbf16>, vector<128x128xbf16>, vector<128x128xf32> -> vector<128x128xf32>
      %47 = arith.truncf %46 : vector<128x128xf32> to vector<128x128xbf16>
      %c0_22 = arith.constant 0 : index
      %c0_23 = arith.constant 0 : index
      %48 = vector.load %arg9[%c0_22, %c0_23] : memref<128x128xbf16, #tpu.memory_space<vmem>>, vector<128x128xbf16>
      tpu.vector_store %arg9[%c0_22, %c0_23], %47 {strides = array<i32>} : memref<128x128xbf16, #tpu.memory_space<vmem>>, vector<128x128xbf16>,
      %c0_24 = arith.constant 0 : index
      %c0_25 = arith.constant 0 : index
      %c0_26 = arith.constant 0 : index
      %49 = vector.load %arg4[%c0_24, %c0_25, %c0_26] : memref<1x1x128xbf16, #tpu.memory_space<vmem>>, vector<1x1x128xbf16>
      %50 = vector.shape_cast %49 : vector<1x1x128xbf16> to vector<1x128xbf16>
      %cst_27 = arith.constant dense<0.000000e+00> : vector<1x128xf32>
      %51 = tpu.matmul %50, %43, %cst_27 {dimension_numbers = #tpu.dot_dimension_numbers<[1], [1], [0], [0], [0, 0, 1, 0], [], []>} : vector<1x128xbf16>, vector<128x128xbf16>, vector<1x128xf32> -> vector<1x128xf32>
      %52 = arith.truncf %51 : vector<1x128xf32> to vector<1x128xbf16>
      %c0_28 = arith.constant 0 : index
      %c0_29 = arith.constant 0 : index
      %53 = vector.load %arg10[%c0_28, %c0_29] : memref<1x128xbf16, #tpu.memory_space<vmem>>, vector<1x128xbf16>
      tpu.vector_store %arg10[%c0_28, %c0_29], %52 {strides = array<i32>} : memref<1x128xbf16, #tpu.memory_space<vmem>>, vector<1x128xbf16>,
    } else {
    }
    %c128_i32 = arith.constant 128 : i32
    %3 = arith.muli %arg1, %c128_i32 : i32
    %4 = tpu.assume_multiple %3, 128 : i32
    %5 = arith.index_cast %4 : i32 to index
    %c127 = arith.constant 127 : index
    %6 = vector.load %arg9[%5, %c127] : memref<128x128xbf16, #tpu.memory_space<vmem>>, vector<128x1xbf16>
    %c0 = arith.constant 0 : index
    %c0_1 = arith.constant 0 : index
    %7 = vector.load %arg10[%c0, %c0_1] : memref<1x128xbf16, #tpu.memory_space<vmem>>, vector<1x128xbf16>
    %8 = vector.broadcast %6 : vector<128x1xbf16> to vector<128x128xbf16>
    %9 = vector.broadcast %7 : vector<1x128xbf16> to vector<128x128xbf16>
    %10 = arith.addf %8, %9 : vector<128x128xbf16>
    %cst = arith.constant 2.001950e-01 : bf16
    %11 = vector.broadcast %cst : bf16 to vector<128x128xbf16>
    %12 = arith.mulf %11, %10 : vector<128x128xbf16>
    %13 = arith.maximumf %10, %12 : vector<128x128xbf16>
    %14 = arith.index_cast %4 : i32 to index
    %c0_2 = arith.constant 0 : index
    %15 = vector.load %arg6[%14, %c0_2] : memref<128x128xbf16, #tpu.memory_space<vmem>>, vector<128x128xbf16>
    %16 = arith.addf %13, %15 : vector<128x128xbf16>
    %cst_3 = arith.constant dense<0xFF80> : vector<128xbf16>
    %17 = vector.multi_reduction <maximumf>, %16, %cst_3 [1] : vector<128x128xbf16> to vector<128xbf16>
    %18 = vector.shape_cast %17 : vector<128xbf16> to vector<128x1xbf16>
    %19 = vector.broadcast %18 : vector<128x1xbf16> to vector<128x128xbf16>
    %20 = arith.subf %16, %19 : vector<128x128xbf16>
    %21 = math.exp %20 : vector<128x128xbf16>
    %22 = arith.extf %21 : vector<128x128xbf16> to vector<128x128xf32>
    %cst_4 = arith.constant dense<0.000000e+00> : vector<128xf32>
    %23 = vector.multi_reduction <add>, %22, %cst_4 [1] : vector<128x128xf32> to vector<128xf32>
    %24 = vector.shape_cast %23 : vector<128xf32> to vector<128x1xf32>
    %c0_5 = arith.constant 0 : index
    %c0_6 = arith.constant 0 : index
    %25 = vector.load %arg9[%c0_5, %c0_6] : memref<128x128xbf16, #tpu.memory_space<vmem>>, vector<128x128xbf16>
    %cst_7 = arith.constant dense<0.000000e+00> : vector<128x128xf32>
    %26 = tpu.matmul %21, %25, %cst_7 {dimension_numbers = #tpu.dot_dimension_numbers<[1], [0], [0], [1], [0, 0, 1, 1], [], []>} : vector<128x128xbf16>, vector<128x128xbf16>, vector<128x128xf32> -> vector<128x128xf32>
    %27 = tpu.reciprocal %24 {approx = true} : vector<128x1xf32> -> vector<128x1xf32>
    %28 = vector.broadcast %27 : vector<128x1xf32> to vector<128x128xf32>
    %29 = arith.mulf %26, %28 : vector<128x128xf32>
    %c0_8 = arith.constant 0 : index
    %c0_9 = arith.constant 0 : index
    %c0_10 = arith.constant 0 : index
    %30 = vector.load %arg5[%c0_8, %c0_9, %c0_10] : memref<1x1x128xf32, #tpu.memory_space<vmem>>, vector<1x1x128xf32>
    %31 = vector.shape_cast %30 : vector<1x1x128xf32> to vector<1x128xf32>
    %32 = vector.broadcast %31 : vector<1x128xf32> to vector<128x128xf32>
    %33 = arith.addf %29, %32 : vector<128x128xf32>
    %c1_i32 = arith.constant 1 : i32
    %34 = arith.cmpi slt, %arg0, %c1_i32 : i32
    %35 = arith.extui %34 : i1 to i32
    %c0_i32_11 = arith.constant 0 : i32
    %36 = arith.cmpi ne, %35, %c0_i32_11 : i32
    scf.if %36 {
      %cst_14 = arith.constant 0.000000e+00 : f32
      %40 = vector.broadcast %cst_14 : f32 to vector<128x128xf32>
      %41 = arith.maximumf %33, %40 : vector<128x128xf32>
      %42 = arith.truncf %41 : vector<128x128xf32> to vector<128x128xbf16>
      %43 = arith.index_cast %4 : i32 to index
      %c0_15 = arith.constant 0 : index
      %44 = vector.load %arg8[%43, %c0_15] : memref<128x128xbf16, #tpu.memory_space<vmem>>, vector<128x128xbf16>
      tpu.vector_store %arg8[%43, %c0_15], %42 {strides = array<i32>} : memref<128x128xbf16, #tpu.memory_space<vmem>>, vector<128x128xbf16>,
    } else {
    }
    %c1_i32_12 = arith.constant 1 : i32
    %37 = arith.cmpi eq, %arg0, %c1_i32_12 : i32
    %38 = arith.extui %37 : i1 to i32
    %c0_i32_13 = arith.constant 0 : i32
    %39 = arith.cmpi ne, %38, %c0_i32_13 : i32
    scf.if %39 {
      %40 = arith.index_cast %4 : i32 to index
      %c0_14 = arith.constant 0 : index
      %41 = vector.load %arg7[%40, %c0_14] : memref<128x128xf32, #tpu.memory_space<vmem>>, vector<128x128xf32>
      tpu.vector_store %arg7[%40, %c0_14], %33 {strides = array<i32>} : memref<128x128xf32, #tpu.memory_space<vmem>>, vector<128x128xf32>,
    } else {
    }
    return
  }
  func.func @transform_1(%arg0: i32, %arg1: i32) -> (i32, i32, i32) {
    %c0_i32 = arith.constant 0 : i32
    %c0_i32_0 = arith.constant 0 : i32
    %c0_i32_1 = arith.constant 0 : i32
    return %arg0, %c0_i32, %c0_i32_0 : i32, i32, i32
  }
  func.func @transform_2(%arg0: i32, %arg1: i32) -> (i32, i32, i32) {
    %c0_i32 = arith.constant 0 : i32
    %c0_i32_0 = arith.constant 0 : i32
    %c0_i32_1 = arith.constant 0 : i32
    return %arg0, %c0_i32, %c0_i32_0 : i32, i32, i32
  }
  func.func @transform_3(%arg0: i32, %arg1: i32) -> (i32, i32, i32) {
    %c0_i32 = arith.constant 0 : i32
    %c0_i32_0 = arith.constant 0 : i32
    %c0_i32_1 = arith.constant 0 : i32
    return %arg0, %c0_i32, %c0_i32_0 : i32, i32, i32
  }
  func.func @transform_4(%arg0: i32, %arg1: i32) -> (i32, i32) {
    %c0_i32 = arith.constant 0 : i32
    %c0_i32_0 = arith.constant 0 : i32
    %c0_i32_1 = arith.constant 0 : i32
    return %c0_i32, %c0_i32_0 : i32, i32
  }
  func.func @transform_5(%arg0: i32, %arg1: i32) -> (i32, i32) {
    %c0_i32 = arith.constant 0 : i32
    %c0_i32_0 = arith.constant 0 : i32
    %c0_i32_1 = arith.constant 0 : i32
    return %c0_i32, %c0_i32_0 : i32, i32
  }
}

</mosaic_0001>

<llo_original>
// kernel: tpu_custom_call.1
$region0: #{tpu_custom_call.1}
  #allocation0 [shape = 'u32[]', space=smem, size = 0x4, offset = 0x4, fixed_abs, tag = 'smem constant byte address 0x4 - core index']
  #allocation1 [shape = 'u32[72,128]{1,0:T(1,128)}', space=vmem, size = 0x9000, scoped, tag = 'internal scratch']
  #allocation2 [shape = 'bf16[128,128]{1,0:T(8,128)(2,1)}', space=vmem, size = 0x8000, scoped, tag = 'scratch operand']
  #allocation3 [shape = 'bf16[128,128]{1,0:T(8,128)(2,1)}', space=vmem, size = 0x8000, scoped, tag = 'scratch operand']
  #allocation4 [shape = 'bf16[1,128]{1,0:T(2,128)(2,1)}', space=vmem, size = 0x200, scoped, tag = 'scratch operand']
  #allocation12 [shape = 's32[]', space=sflag, size = 0x4, offset = 0, fixed_abs, tag = 'sflag constant byte address 0x0 - dummy sync flag']
  #allocation13 [shape = 's32[]', space=sflag, size = 0x4, offset = 0, fixed_abs, tag = 'sflag constant byte address 0x0 - dummy sync flag']
  #allocation14 [shape = 'u32[]', space=smem, size = 0x4, offset = 0x44, fixed_abs, tag = 'smem constant byte address 0x44 - assertion arg 0']
  #allocation15 [shape = 'u32[]', space=smem, size = 0x4, offset = 0x48, fixed_abs, tag = 'smem constant byte address 0x48 - assertion arg 1']
  %s0 = inlined_call_operand.hbm [shape: bf16[128,128], index: 0, kind: input, shape index: {}]
  %s1 = inlined_call_operand.hbm [shape: bf16[2,128,128], index: 1, kind: input, shape index: {}]
  %s2 = inlined_call_operand.vmem [shape: bf16[2,1,128], index: 2, kind: input, shape index: {}]
  %s3 = inlined_call_operand.vmem [shape: f32[2,1,128], index: 3, kind: input, shape index: {}]
  %s4 = inlined_call_operand.hbm [shape: bf16[128,128], index: 4, kind: input, shape index: {}]
  %s5 = inlined_call_operand.hbm [shape: f32[128,128], index: 5, kind: output, shape index: {}]
  %s6 = sld [smem:[#allocation0]]
  $region78: #{tpu_custom_call.1} parent=0
    _
  %s8 = ssub.s32 1, %s6
  %s9 = scalar_select 0, %s8, %s6
  $region1: #{tpu_custom_call.1} parent=0
    #allocation5 [shape = 'u8[65536]{0}', space=vmem, size = 0x10000, scoped, tag = 'input window, operand 1']
    #allocation6 [shape = 's32[2]{0}', space=sflag, size = 0x8, scoped, tag = 'scoped memory for tpu_custom_call.1']
    #allocation7 [shape = 's32[2]{0}', space=sflag, size = 0x8, scoped, tag = 'scoped memory for tpu_custom_call.1']
    #allocation8 [shape = 'u8[32768]{0}', space=vmem, size = 0x8000, scoped, tag = 'input window, operand 4, single buffered']
    #allocation9 [shape = 's32[1]{0}', space=sflag, size = 0x4, scoped, tag = 'scoped memory for tpu_custom_call.1']
    #allocation10 [shape = 'u8[65536]{0}', space=vmem, size = 0x10000, scoped, tag = 'output window, operand 0, single buffered']
    %10 = vsyncpa [#allocation6], 0
    %s11 = scalar_lea.sflag [#allocation6], 1
    %12 = vsyncpa %s11, 0
    %13 = vsyncpa [#allocation9], 0
    %14 = vsyncpa [#allocation7], 0
    loop: start=0, step=1, limit=4
    $region2: #{tpu_custom_call.1} parent=1 // loop_pre_header
      _
    $region3: #{tpu_custom_call.1} parent=1 // loop_header
      %s16 = sphi 0, %s20
      %p17 = scmp.ge.s32.totalorder %s16, 4
      %s23 = sphi 0, %s35
      %s24 = sphi 0, %s31
      %s25 = sphi 0, %s23
      %s26 = sphi 0, %s24
      %s27 = sphi 0, %s25
      %s28 = sphi 0, %s26
      %s38 = sphi 0, %s40
      %s41 = sphi 0, %s38
      %s42 = sphi 0, %s41
      %s58 = sphi 0, %s42
      %s64 = sphi 0, %s66
      %s67 = sphi 0, %s64
      %s68 = sphi 0, %s67
      %s84 = sphi 0, %s68
      %s90 = sphi 0, %s92
      %s93 = sphi 0, %s90
      %s94 = sphi 0, %s93
      %s110 = sphi 0, %s94
      %s114 = sphi 0, %s114
      %s116 = sphi 0, %s114
      %s117 = sphi 0, %s116
      %s131 = sphi 0, %s117
      %s135 = sphi 0, %s135
      %s137 = sphi 0, %s135
      %s138 = sphi 0, %s137
      %s152 = sphi 0, %s138
    $region4: #{tpu_custom_call.1} parent=1 // loop_header_branch
      %19 = sbr.rel (%p17) target = $region8
    $region5: #{tpu_custom_call.1} parent=1 // loop_body
      %s21 = ssub.s32 %s16, 1
      %s22 = ssub.s32 %s16, 2
      %s29 = sadd.s32 1, %s24
      %p30 = scmp.ge.s32.totalorder %s29, 1
      %s31 = scalar_select %p30, 0, %s29
      %s32 = sadd.s32 1, %s23
      %s33 = scalar_select %p30, %s32, %s23
      %p34 = scmp.ge.s32.totalorder %s33, 2
      %s35 = scalar_select %p34, 0, %s33
      %s36 = ssub.s32 %s23, %s35
      %p37 = scmp.eq.s32.totalorder %s36, 0
      %s39 = sadd.s32 %s38, 1
      %s40 = scalar_select %p37, %s38, %s39
      %p43 = pneg %p37
      %p44 = scmp.eq.s32.totalorder %s16, 1
      %p45 = por %p43, %p44
      %p46 = scmp.ne.s32.totalorder %s38, %s41
      %p47 = scmp.eq.s32.totalorder %s16, 0
      %p48 = por %p46, %p47
      %p49 = scmp.ne.s32.totalorder %s38, %s41
      %p50 = scmp.eq.s32.totalorder %s21, 1
      %p51 = por %p49, %p50
      %p52 = scmp.ne.s32.totalorder %s41, %s42
      %p53 = scmp.eq.s32.totalorder %s21, 0
      %p54 = por %p52, %p53
      %p55 = scmp.ne.s32.totalorder %s41, %s42
      %p56 = scmp.eq.s32.totalorder %s22, 1
      %p57 = por %p55, %p56
      %p59 = scmp.ne.s32.totalorder %s42, %s58
      %p60 = scmp.eq.s32.totalorder %s22, 0
      %p61 = por %p59, %p60
      %s62 = ssub.s32 %s23, %s35
      %p63 = scmp.eq.s32.totalorder %s62, 0
      %s65 = sadd.s32 %s64, 1
      %s66 = scalar_select %p63, %s64, %s65
      %p69 = pneg %p63
      %p70 = scmp.eq.s32.totalorder %s16, 1
      %p71 = por %p69, %p70
      %p72 = scmp.ne.s32.totalorder %s64, %s67
      %p73 = scmp.eq.s32.totalorder %s16, 0
      %p74 = por %p72, %p73
      %p75 = scmp.ne.s32.totalorder %s64, %s67
      %p76 = scmp.eq.s32.totalorder %s21, 1
      %p77 = por %p75, %p76
      %p78 = scmp.ne.s32.totalorder %s67, %s68
      %p79 = scmp.eq.s32.totalorder %s21, 0
      %p80 = por %p78, %p79
      %p81 = scmp.ne.s32.totalorder %s67, %s68
      %p82 = scmp.eq.s32.totalorder %s22, 1
      %p83 = por %p81, %p82
      %p85 = scmp.ne.s32.totalorder %s68, %s84
      %p86 = scmp.eq.s32.totalorder %s22, 0
      %p87 = por %p85, %p86
      %s88 = ssub.s32 %s23, %s35
      %p89 = scmp.eq.s32.totalorder %s88, 0
      %s91 = sadd.s32 %s90, 1
      %s92 = scalar_select %p89, %s90, %s91
      %p95 = pneg %p89
      %p96 = scmp.eq.s32.totalorder %s16, 1
      %p97 = por %p95, %p96
      %p98 = scmp.ne.s32.totalorder %s90, %s93
      %p99 = scmp.eq.s32.totalorder %s16, 0
      %p100 = por %p98, %p99
      %p101 = scmp.ne.s32.totalorder %s90, %s93
      %p102 = scmp.eq.s32.totalorder %s21, 1
      %p103 = por %p101, %p102
      %p104 = scmp.ne.s32.totalorder %s93, %s94
      %p105 = scmp.eq.s32.totalorder %s21, 0
      %p106 = por %p104, %p105
      %p107 = scmp.ne.s32.totalorder %s93, %s94
      %p108 = scmp.eq.s32.totalorder %s22, 1
      %p109 = por %p107, %p108
      %p111 = scmp.ne.s32.totalorder %s94, %s110
      %p112 = scmp.eq.s32.totalorder %s22, 0
      %p113 = por %p111, %p112
      %s115 = sadd.s32 %s114, 1
      %p118 = scmp.eq.s32.totalorder %s16, 1
      %p119 = scmp.ne.s32.totalorder %s114, %s116
      %p120 = scmp.eq.s32.totalorder %s16, 0
      %p121 = por %p119, %p120
      %p122 = scmp.ne.s32.totalorder %s114, %s116
      %p123 = scmp.eq.s32.totalorder %s21, 1
      %p124 = por %p122, %p123
      %p125 = scmp.ne.s32.totalorder %s116, %s117
      %p126 = scmp.eq.s32.totalorder %s21, 0
      %p127 = por %p125, %p126
      %p128 = scmp.ne.s32.totalorder %s116, %s117
      %p129 = scmp.eq.s32.totalorder %s22, 1
      %p130 = por %p128, %p129
      %p132 = scmp.ne.s32.totalorder %s117, %s131
      %p133 = scmp.eq.s32.totalorder %s22, 0
      %p134 = por %p132, %p133
      %s136 = sadd.s32 %s135, 1
      %p139 = scmp.eq.s32.totalorder %s16, 1
      %p140 = scmp.ne.s32.totalorder %s135, %s137
      %p141 = scmp.eq.s32.totalorder %s16, 0
      %p142 = por %p140, %p141
      %p143 = scmp.ne.s32.totalorder %s135, %s137
      %p144 = scmp.eq.s32.totalorder %s21, 1
      %p145 = por %p143, %p144
      %p146 = scmp.ne.s32.totalorder %s137, %s138
      %p147 = scmp.eq.s32.totalorder %s21, 0
      %p148 = por %p146, %p147
      %p149 = scmp.ne.s32.totalorder %s137, %s138
      %p150 = scmp.eq.s32.totalorder %s22, 1
      %p151 = por %p149, %p150
      %p153 = scmp.ne.s32.totalorder %s138, %s152
      %p154 = scmp.eq.s32.totalorder %s22, 0
      %p155 = por %p153, %p154
      %p156 = scmp.le.s32.totalorder 1, %s16
      %p157 = scmp.lt.s32.totalorder %s16, 3
      %p158 = pnand %p156, %p157
      %p159 = pneg %p158
      // Predicated region
      $region9: #{tpu_custom_call.1} parent=5 // pred_check
        _
      $region10: #{tpu_custom_call.1} parent=5 // pred_check_branch
        %161 = sbr.rel (%p158) target = $region12
      $region11: #{tpu_custom_call.1} parent=5 // pred_region
        %s162 = ssub.s32 %s16, 1
        // Predicated region
        $region13: #{tpu_custom_call.1} parent=11 // pred_check
          %p163 = pneg %p127
        $region14: #{tpu_custom_call.1} parent=11 // pred_check_branch
          %165 = sbr.rel (%p163) target = $region16
        $region15: #{tpu_custom_call.1} parent=11 // pred_region
          %167 = vsyncadd [#allocation9], 0
          %s168 = sshll.u32 %s4, 4
          %s169 = int_to_ptr.hbm [resolvable:$true] %s168
          %s170 = sshll.u32 [#allocation8], 4
          %s171 = int_to_ptr.vmem [resolvable:$true] %s170
          %176 = dma.hbm_to_vmem [thread:$0]  %s169, 1024, %s171, [#allocation9], 64, 64, 4
        $region16: #{tpu_custom_call.1} parent=11 // pred_fallthru
          _
      $region12: #{tpu_custom_call.1} parent=5 // pred_fallthru
        _
      %p177 = scmp.lt.s32.totalorder %s16, 2
      // Predicated region
      $region17: #{tpu_custom_call.1} parent=5 // pred_check
        %p178 = pneg %p177
      $region18: #{tpu_custom_call.1} parent=5 // pred_check_branch
        %180 = sbr.rel (%p178) target = $region20
      $region19: #{tpu_custom_call.1} parent=5 // pred_region
        // Predicated region
        $region21: #{tpu_custom_call.1} parent=19 // pred_check
          %p181 = pneg %p48
        $region22: #{tpu_custom_call.1} parent=19 // pred_check_branch
          %183 = sbr.rel (%p181) target = $region24
        $region23: #{tpu_custom_call.1} parent=19 // pred_region
          %s184 = sand.u32 %s38, 1
          %s185 = scalar_lea.sflag [#allocation6], %s184
          %s186 = sand.u32 %s38, 1
          %s187 = smul.addr %s186, 64
          %s188 = scalar_lea.vmem [#allocation5], %s187
          %190 = vsyncadd %s185, 0
          %s191 = smul.addr %s23, 16
          %s192 = smul.addr %s191, 4
          %s193 = scalar_lea.hbm %s1, %s192
          %s194 = sshll.u32 %s193, 4
          %s195 = int_to_ptr.hbm [resolvable:$true] %s194
          %s196 = sshll.u32 %s188, 4
          %s197 = int_to_ptr.vmem [resolvable:$true] %s196
          %202 = dma.hbm_to_vmem [thread:$0]  %s195, 1024, %s197, %s185, 64, 64, 4
        $region24: #{tpu_custom_call.1} parent=19 // pred_fallthru
          _
        // Predicated region
        $region25: #{tpu_custom_call.1} parent=19 // pred_check
          %p203 = pneg %p74
        $region26: #{tpu_custom_call.1} parent=19 // pred_check_branch
          %205 = sbr.rel (%p203) target = $region28
        $region27: #{tpu_custom_call.1} parent=19 // pred_region
          %p206 = scmp.lt.s32.totalorder %s23, 1
          %s207 = scalar_select %p206, %s23, 1
          %s208 = scalar_lea.vmem %s2, %s207
        $region28: #{tpu_custom_call.1} parent=19 // pred_fallthru
          _
        // Predicated region
        $region29: #{tpu_custom_call.1} parent=19 // pred_check
          %p209 = pneg %p100
        $region30: #{tpu_custom_call.1} parent=19 // pred_check_branch
          %211 = sbr.rel (%p209) target = $region32
        $region31: #{tpu_custom_call.1} parent=19 // pred_region
          %p212 = scmp.lt.s32.totalorder %s23, 1
          %s213 = scalar_select %p212, %s23, 1
          %s214 = scalar_lea.vmem %s3, %s213
        $region32: #{tpu_custom_call.1} parent=19 // pred_fallthru
          _
      $region20: #{tpu_custom_call.1} parent=5 // pred_fallthru
        _
      %p215 = scmp.le.s32.totalorder 1, %s16
      %p216 = scmp.lt.s32.totalorder %s16, 3
      %p217 = pnand %p215, %p216
      %p218 = pneg %p217
      // Predicated region
      $region33: #{tpu_custom_call.1} parent=5 // pred_check
        _
      $region34: #{tpu_custom_call.1} parent=5 // pred_check_branch
        %220 = sbr.rel (%p217) target = $region36
      $region35: #{tpu_custom_call.1} parent=5 // pred_region
        %s221 = ssub.s32 %s16, 1
        %s222 = sand.u32 %s41, 1
        %s223 = scalar_lea.sflag [#allocation6], %s222
        %s224 = sand.u32 %s41, 1
        %s225 = smul.addr %s224, 64
        %s226 = scalar_lea.vmem [#allocation5], %s225
        // Predicated region
        $region37: #{tpu_custom_call.1} parent=35 // pred_check
          %p227 = pneg %p54
        $region38: #{tpu_custom_call.1} parent=35 // pred_check_branch
          %229 = sbr.rel (%p227) target = $region40
        $region39: #{tpu_custom_call.1} parent=35 // pred_region
          %231 = dma.done %s223, 1024
        $region40: #{tpu_custom_call.1} parent=35 // pred_fallthru
          _
        // Predicated region
        $region41: #{tpu_custom_call.1} parent=35 // pred_check
          %p232 = pneg %p127
        $region42: #{tpu_custom_call.1} parent=35 // pred_check_branch
          %234 = sbr.rel (%p232) target = $region44
        $region43: #{tpu_custom_call.1} parent=35 // pred_region
          %236 = dma.done [#allocation9], 1024
        $region44: #{tpu_custom_call.1} parent=35 // pred_fallthru
          _
        %s237 = sand.u32 %s41, 1
        %s238 = scalar_lea.sflag [#allocation6], %s237
        %s239 = sand.u32 %s41, 1
        %s240 = smul.addr %s239, 64
        %s241 = scalar_lea.vmem [#allocation5], %s240
        %p242 = pneg %p54
        %p243 = pneg %p51
        %p244 = scmp.lt.s32.totalorder %s25, 1
        %s245 = scalar_select %p244, %s25, 1
        %s246 = scalar_lea.vmem %s2, %s245
        %p247 = pneg %p80
        %p248 = pneg %p77
        %p249 = scmp.lt.s32.totalorder %s25, 1
        %s250 = scalar_select %p249, %s25, 1
        %s251 = scalar_lea.vmem %s3, %s250
        %p252 = pneg %p106
        %p253 = pneg %p103
        %p254 = pneg %p127
        %p255 = pneg %p124
        %p256 = pneg %p148
        %p257 = pneg %p145
        %p258 = scmp.lt.s32.totalorder %s25, 1
        %s259 = scalar_select %p258, %s25, 1
        %s260 = scalar_lea.vmem %s2, %s259
        %p261 = scmp.lt.s32.totalorder %s25, 1
        %s262 = scalar_select %p261, %s25, 1
        %s263 = scalar_lea.vmem %s3, %s262
        %p264 = scmp.eq.s32.totalorder %s26, 0
        // Predicated region
        $region45: #{tpu_custom_call.1} parent=35 // pred_check
          %p265 = pneg %p264
        $region46: #{tpu_custom_call.1} parent=35 // pred_check_branch
          %267 = sbr.rel (%p265) target = $region48
        $region47: #{tpu_custom_call.1} parent=35 // pred_region
          %p268 = scmp.eq.s32.totalorder %s25, 0
          // Predicated region
          $region49: #{tpu_custom_call.1} parent=47 // pred_check
            %p269 = pneg %p268
          $region50: #{tpu_custom_call.1} parent=47 // pred_check_branch
            %271 = sbr.rel (%p269) target = $region52
          $region51: #{tpu_custom_call.1} parent=47 // pred_region
            $region53: #{tpu_custom_call.1} parent=51
              #allocation11 [shape = 's32[1]{0}', space=sflag, size = 0x4, scoped, tag = 'scoped memory for tpu_custom_call.1']
              // Predicated region
              $region54: #{tpu_custom_call.1} parent=53 // pred_check
                _
              $region55: #{tpu_custom_call.1} parent=53 // pred_check_branch
                %273 = sbr.rel target = $region57
              $region56: #{tpu_custom_call.1} parent=53 // pred_region
                %274 = sst [smem:[#allocation14]] [#allocation13]
                %275 = sst [smem:[#allocation15]] [#allocation12]
              $region57: #{tpu_custom_call.1} parent=53 // pred_fallthru
                _
              %277 = shalt.err (0)
              %s279 = sshll.u32 %s0, 4
              %s280 = int_to_ptr.hbm [resolvable:$true] %s279
              %s281 = sshll.u32 [#allocation2], 4
              %s282 = int_to_ptr.vmem [resolvable:$true] %s281
              %284 = dma.hbm_to_vmem [thread:$0]  %s280, 1024, %s282, [#allocation11]
              %s285 = smul.u32 4, 16
              %s286 = smul.u32 %s285, 1
              %s287 = sshll.u32 %s286, 4
              %288 = dma.done [#allocation11], %s287
          $region52: #{tpu_custom_call.1} parent=47 // pred_fallthru
            _
          %v289 = vld [vmem:[#allocation2] sm:$0xf]
          %v290 = vld [vmem:[#allocation2 + $0x4] sm:$0xf]
          %v291 = vld [vmem:[#allocation2 + $0x8] sm:$0xf]
          %v292 = vld [vmem:[#allocation2 + $0xc] sm:$0xf]
          %v293 = vld [vmem:[#allocation2 + $0x10] sm:$0xf]
          %v294 = vld [vmem:[#allocation2 + $0x14] sm:$0xf]
          %v295 = vld [vmem:[#allocation2 + $0x18] sm:$0xf]
          %v296 = vld [vmem:[#allocation2 + $0x1c] sm:$0xf]
          %v297 = vld [vmem:[#allocation2 + $0x20] sm:$0xf]
          %v298 = vld [vmem:[#allocation2 + $0x24] sm:$0xf]
          %v299 = vld [vmem:[#allocation2 + $0x28] sm:$0xf]
          %v300 = vld [vmem:[#allocation2 + $0x2c] sm:$0xf]
          %v301 = vld [vmem:[#allocation2 + $0x30] sm:$0xf]
          %v302 = vld [vmem:[#allocation2 + $0x34] sm:$0xf]
          %v303 = vld [vmem:[#allocation2 + $0x38] sm:$0xf]
          %v304 = vld [vmem:[#allocation2 + $0x3c] sm:$0xf]
          %v305 = vld [vmem:[%s226] sm:$0xf]
          %v306 = vld [vmem:[%s226 + $0x4] sm:$0xf]
          %v307 = vld [vmem:[%s226 + $0x8] sm:$0xf]
          %v308 = vld [vmem:[%s226 + $0xc] sm:$0xf]
          %v309 = vld [vmem:[%s226 + $0x10] sm:$0xf]
          %v310 = vld [vmem:[%s226 + $0x14] sm:$0xf]
          %v311 = vld [vmem:[%s226 + $0x18] sm:$0xf]
          %v312 = vld [vmem:[%s226 + $0x1c] sm:$0xf]
          %v313 = vld [vmem:[%s226 + $0x20] sm:$0xf]
          %v314 = vld [vmem:[%s226 + $0x24] sm:$0xf]
          %v315 = vld [vmem:[%s226 + $0x28] sm:$0xf]
          %v316 = vld [vmem:[%s226 + $0x2c] sm:$0xf]
          %v317 = vld [vmem:[%s226 + $0x30] sm:$0xf]
          %v318 = vld [vmem:[%s226 + $0x34] sm:$0xf]
          %v319 = vld [vmem:[%s226 + $0x38] sm:$0xf]
          %v320 = vld [vmem:[%s226 + $0x3c] sm:$0xf]
          %v337 = vunpack.c.l.b16 %v289
          %v338 = vunpack.c.l.b16 %v290
          %v339 = vunpack.c.l.b16 %v291
          %v340 = vunpack.c.l.b16 %v292
          %v341 = vunpack.c.l.b16 %v293
          %v342 = vunpack.c.l.b16 %v294
          %v343 = vunpack.c.l.b16 %v295
          %v344 = vunpack.c.l.b16 %v296
          %v345 = vunpack.c.l.b16 %v297
          %v346 = vunpack.c.l.b16 %v298
          %v347 = vunpack.c.l.b16 %v299
          %v348 = vunpack.c.l.b16 %v300
          %v349 = vunpack.c.l.b16 %v301
          %v350 = vunpack.c.l.b16 %v302
          %v351 = vunpack.c.l.b16 %v303
          %v352 = vunpack.c.l.b16 %v304
          %v353 = vpack.c.b16 %v338, %v337
          %v354 = vpack.c.b16 %v340, %v339
          %v355 = vpack.c.b16 %v342, %v341
          %v356 = vpack.c.b16 %v344, %v343
          %v357 = vpack.c.b16 %v346, %v345
          %v358 = vpack.c.b16 %v348, %v347
          %v359 = vpack.c.b16 %v350, %v349
          %v360 = vpack.c.b16 %v352, %v351
          %v385 = vunpack.c.l.b16 %v305
          %v386 = vunpack.c.l.b16 %v306
          %v387 = vunpack.c.l.b16 %v307
          %v388 = vunpack.c.l.b16 %v308
          %v389 = vunpack.c.l.b16 %v309
          %v390 = vunpack.c.l.b16 %v310
          %v391 = vunpack.c.l.b16 %v311
          %v392 = vunpack.c.l.b16 %v312
          %v393 = vunpack.c.l.b16 %v313
          %v394 = vunpack.c.l.b16 %v314
          %v395 = vunpack.c.l.b16 %v315
          %v396 = vunpack.c.l.b16 %v316
          %v397 = vunpack.c.l.b16 %v317
          %v398 = vunpack.c.l.b16 %v318
          %v399 = vunpack.c.l.b16 %v319
          %v400 = vunpack.c.l.b16 %v320
          %v401 = vpack.c.b16 %v386, %v385
          %v402 = vpack.c.b16 %v388, %v387
          %v403 = vpack.c.b16 %v390, %v389
          %v404 = vpack.c.b16 %v392, %v391
          %v405 = vpack.c.b16 %v394, %v393
          %v406 = vpack.c.b16 %v396, %v395
          %v407 = vpack.c.b16 %v398, %v397
          %v408 = vpack.c.b16 %v400, %v399
          %417 = vmatpush.bf16.msra.mxu0 %v408
          %418 = vmatpush.bf16.msra.mxu0 %v407
          %419 = vmatpush.bf16.msra.mxu0 %v406
          %420 = vmatpush.bf16.msra.mxu0 %v405
          %421 = vmatpush.bf16.msra.mxu0 %v404
          %422 = vmatpush.bf16.msra.mxu0 %v403
          %423 = vmatpush.bf16.msra.mxu0 %v402
          %424 = vmatpush.bf16.msra.mxu0 %v401
          %425 = vmatmul.bf16.gmra.mxu0 %v353
          %v426 = vpop.f32.mrf.mxu0
          %v427 = vadd.f32 0.0, %v426
          %v428 = vpop.f32.mrf.mxu0
          %v429 = vadd.f32 0.0, %v428
          %430 = vmatmul.bf16.gmra.mxu0 %v354
          %v431 = vpop.f32.mrf.mxu0
          %v432 = vadd.f32 0.0, %v431
          %v433 = vpop.f32.mrf.mxu0
          %v434 = vadd.f32 0.0, %v433
          %435 = vmatmul.bf16.gmra.mxu0 %v355
          %v436 = vpop.f32.mrf.mxu0
          %v437 = vadd.f32 0.0, %v436
          %v438 = vpop.f32.mrf.mxu0
          %v439 = vadd.f32 0.0, %v438
          %440 = vmatmul.bf16.gmra.mxu0 %v356
          %v441 = vpop.f32.mrf.mxu0
          %v442 = vadd.f32 0.0, %v441
          %v443 = vpop.f32.mrf.mxu0
          %v444 = vadd.f32 0.0, %v443
          %445 = vmatmul.bf16.gmra.mxu0 %v357
          %v446 = vpop.f32.mrf.mxu0
          %v447 = vadd.f32 0.0, %v446
          %v448 = vpop.f32.mrf.mxu0
          %v449 = vadd.f32 0.0, %v448
          %450 = vmatmul.bf16.gmra.mxu0 %v358
          %v451 = vpop.f32.mrf.mxu0
          %v452 = vadd.f32 0.0, %v451
          %v453 = vpop.f32.mrf.mxu0
          %v454 = vadd.f32 0.0, %v453
          %455 = vmatmul.bf16.gmra.mxu0 %v359
          %v456 = vpop.f32.mrf.mxu0
          %v457 = vadd.f32 0.0, %v456
          %v458 = vpop.f32.mrf.mxu0
          %v459 = vadd.f32 0.0, %v458
          %460 = vmatmul.bf16.gmra.mxu0 %v360
          %v461 = vpop.f32.mrf.mxu0
          %v462 = vadd.f32 0.0, %v461
          %v463 = vpop.f32.mrf.mxu0
          %v464 = vadd.f32 0.0, %v463
          %465 = vdwg.mxu0
          %v466 = vpack.c.bf16 %v427, %v427
          %v467 = vpack.c.bf16 %v429, %v429
          %v468 = vpack.c.bf16 %v432, %v432
          %v469 = vpack.c.bf16 %v434, %v434
          %v470 = vpack.c.bf16 %v437, %v437
          %v471 = vpack.c.bf16 %v439, %v439
          %v472 = vpack.c.bf16 %v442, %v442
          %v473 = vpack.c.bf16 %v444, %v444
          %v474 = vpack.c.bf16 %v447, %v447
          %v475 = vpack.c.bf16 %v449, %v449
          %v476 = vpack.c.bf16 %v452, %v452
          %v477 = vpack.c.bf16 %v454, %v454
          %v478 = vpack.c.bf16 %v457, %v457
          %v479 = vpack.c.bf16 %v459, %v459
          %v480 = vpack.c.bf16 %v462, %v462
          %v481 = vpack.c.bf16 %v464, %v464
          %482 = vst [vmem:[#allocation3] sm:$0xf] %v466
          %483 = vst [vmem:[#allocation3 + $0x4] sm:$0xf] %v467
          %484 = vst [vmem:[#allocation3 + $0x8] sm:$0xf] %v468
          %485 = vst [vmem:[#allocation3 + $0xc] sm:$0xf] %v469
          %486 = vst [vmem:[#allocation3 + $0x10] sm:$0xf] %v470
          %487 = vst [vmem:[#allocation3 + $0x14] sm:$0xf] %v471
          %488 = vst [vmem:[#allocation3 + $0x18] sm:$0xf] %v472
          %489 = vst [vmem:[#allocation3 + $0x1c] sm:$0xf] %v473
          %490 = vst [vmem:[#allocation3 + $0x20] sm:$0xf] %v474
          %491 = vst [vmem:[#allocation3 + $0x24] sm:$0xf] %v475
          %492 = vst [vmem:[#allocation3 + $0x28] sm:$0xf] %v476
          %493 = vst [vmem:[#allocation3 + $0x2c] sm:$0xf] %v477
          %494 = vst [vmem:[#allocation3 + $0x30] sm:$0xf] %v478
          %495 = vst [vmem:[#allocation3 + $0x34] sm:$0xf] %v479
          %496 = vst [vmem:[#allocation3 + $0x38] sm:$0xf] %v480
          %497 = vst [vmem:[#allocation3 + $0x3c] sm:$0xf] %v481
          %v498 = vld [vmem:[%s260] sm:$0x1]
          %499 = vmatpush.bf16.xpose.msra.mxu0 %v360
          %500 = vmatpush.bf16.xpose.msra.mxu0 %v359
          %501 = vmatpush.bf16.xpose.msra.mxu0 %v358
          %502 = vmatpush.bf16.xpose.msra.mxu0 %v357
          %503 = vmatpush.bf16.xpose.msra.mxu0 %v356
          %504 = vmatpush.bf16.xpose.msra.mxu0 %v355
          %505 = vmatpush.bf16.xpose.msra.mxu0 %v354
          %506 = vmatpush.bf16.xpose.msra.mxu0 %v353
          %507 = vmatmul.bf16.gmra.mxu0 %v498
          %v508 = vpop.f32.mrf.mxu0
          %v509 = vadd.f32 0.0, %v508
          %v510 = vpop.f32.mrf.mxu0
          %511 = vdwg.mxu0
          %v512 = vpack.c.bf16 %v509, %v509
          %vm513 = vcmask 1040384
          %vm514 = vsmask.f32 256
          %vm515 = vmand %vm513, %vm514
          %v516 = vld [vmem:[#allocation4] sm:$0x1]
          %v517 = vsel %vm515, %v512, %v516
          %518 = vst [vmem:[#allocation4] sm:$0x1] %v517
        $region48: #{tpu_custom_call.1} parent=35 // pred_fallthru
          _
        %s519 = smul.u32 %s26, 128
        %s520 = sshra.s32 %s519, 3
        %s521 = sand.u32 %s519, 7
        %s522 = smul.addr %s520, 4
        %s523 = scalar_lea.vmem [#allocation3], %s522
        %v524 = vld [vmem:[%s523] sm:$0xf]
        %v525 = vld [vmem:[%s523 + $0x4] sm:$0xf]
        %v526 = vld [vmem:[%s523 + $0x8] sm:$0xf]
        %v527 = vld [vmem:[%s523 + $0xc] sm:$0xf]
        %v528 = vld [vmem:[%s523 + $0x10] sm:$0xf]
        %v529 = vld [vmem:[%s523 + $0x14] sm:$0xf]
        %v530 = vld [vmem:[%s523 + $0x18] sm:$0xf]
        %v531 = vld [vmem:[%s523 + $0x1c] sm:$0xf]
        %v532 = vld [vmem:[%s523 + $0x20] sm:$0xf]
        %v533 = vld [vmem:[%s523 + $0x24] sm:$0xf]
        %v534 = vld [vmem:[%s523 + $0x28] sm:$0xf]
        %v535 = vld [vmem:[%s523 + $0x2c] sm:$0xf]
        %v536 = vld [vmem:[%s523 + $0x30] sm:$0xf]
        %v537 = vld [vmem:[%s523 + $0x34] sm:$0xf]
        %v538 = vld [vmem:[%s523 + $0x38] sm:$0xf]
        %v539 = vld [vmem:[%s523 + $0x3c] sm:$0xf]
        %v540 = vld [vmem:[#allocation4] sm:$0x1]
        %542 = vset.pattern.permute.xlu0 127
        %543 = vperm.xlu0 %542, %v524
        %v544 = vpop.permute.xlu0 %543
        %v547 = vunpack.c.l.s4 839922192
        %v548 = vunpack.c.0.s8 %v547
        %v549 = vperm.slane %v544, %v548
        %551 = vset.pattern.permute.xlu0 127
        %552 = vperm.xlu0 %551, %v525
        %v553 = vpop.permute.xlu0 %552
        %v556 = vunpack.c.l.s4 839922192
        %v557 = vunpack.c.0.s8 %v556
        %v558 = vperm.slane %v553, %v557
        %560 = vset.pattern.permute.xlu0 127
        %561 = vperm.xlu0 %560, %v526
        %v562 = vpop.permute.xlu0 %561
        %v565 = vunpack.c.l.s4 839922192
        %v566 = vunpack.c.0.s8 %v565
        %v567 = vperm.slane %v562, %v566
        %569 = vset.pattern.permute.xlu0 127
        %570 = vperm.xlu0 %569, %v527
        %v571 = vpop.permute.xlu0 %570
        %v574 = vunpack.c.l.s4 839922192
        %v575 = vunpack.c.0.s8 %v574
        %v576 = vperm.slane %v571, %v575
        %578 = vset.pattern.permute.xlu0 127
        %579 = vperm.xlu0 %578, %v528
        %v580 = vpop.permute.xlu0 %579
        %v583 = vunpack.c.l.s4 839922192
        %v584 = vunpack.c.0.s8 %v583
        %v585 = vperm.slane %v580, %v584
        %587 = vset.pattern.permute.xlu0 127
        %588 = vperm.xlu0 %587, %v529
        %v589 = vpop.permute.xlu0 %588
        %v592 = vunpack.c.l.s4 839922192
        %v593 = vunpack.c.0.s8 %v592
        %v594 = vperm.slane %v589, %v593
        %596 = vset.pattern.permute.xlu0 127
        %597 = vperm.xlu0 %596, %v530
        %v598 = vpop.permute.xlu0 %597
        %v601 = vunpack.c.l.s4 839922192
        %v602 = vunpack.c.0.s8 %v601
        %v603 = vperm.slane %v598, %v602
        %605 = vset.pattern.permute.xlu0 127
        %606 = vperm.xlu0 %605, %v531
        %v607 = vpop.permute.xlu0 %606
        %v610 = vunpack.c.l.s4 839922192
        %v611 = vunpack.c.0.s8 %v610
        %v612 = vperm.slane %v607, %v611
        %614 = vset.pattern.permute.xlu0 127
        %615 = vperm.xlu0 %614, %v532
        %v616 = vpop.permute.xlu0 %615
        %v619 = vunpack.c.l.s4 839922192
        %v620 = vunpack.c.0.s8 %v619
        %v621 = vperm.slane %v616, %v620
        %623 = vset.pattern.permute.xlu0 127
        %624 = vperm.xlu0 %623, %v533
        %v625 = vpop.permute.xlu0 %624
        %v628 = vunpack.c.l.s4 839922192
        %v629 = vunpack.c.0.s8 %v628
        %v630 = vperm.slane %v625, %v629
        %632 = vset.pattern.permute.xlu0 127
        %633 = vperm.xlu0 %632, %v534
        %v634 = vpop.permute.xlu0 %633
        %v637 = vunpack.c.l.s4 839922192
        %v638 = vunpack.c.0.s8 %v637
        %v639 = vperm.slane %v634, %v638
        %641 = vset.pattern.permute.xlu0 127
        %642 = vperm.xlu0 %641, %v535
        %v643 = vpop.permute.xlu0 %642
        %v646 = vunpack.c.l.s4 839922192
        %v647 = vunpack.c.0.s8 %v646
        %v648 = vperm.slane %v643, %v647
        %650 = vset.pattern.permute.xlu0 127
        %651 = vperm.xlu0 %650, %v536
        %v652 = vpop.permute.xlu0 %651
        %v655 = vunpack.c.l.s4 839922192
        %v656 = vunpack.c.0.s8 %v655
        %v657 = vperm.slane %v652, %v656
        %659 = vset.pattern.permute.xlu0 127
        %660 = vperm.xlu0 %659, %v537
        %v661 = vpop.permute.xlu0 %660
        %v664 = vunpack.c.l.s4 839922192
        %v665 = vunpack.c.0.s8 %v664
        %v666 = vperm.slane %v661, %v665
        %668 = vset.pattern.permute.xlu0 127
        %669 = vperm.xlu0 %668, %v538
        %v670 = vpop.permute.xlu0 %669
        %v673 = vunpack.c.l.s4 839922192
        %v674 = vunpack.c.0.s8 %v673
        %v675 = vperm.slane %v670, %v674
        %677 = vset.pattern.permute.xlu0 127
        %678 = vperm.xlu0 %677, %v539
        %v679 = vpop.permute.xlu0 %678
        %v682 = vunpack.c.l.s4 839922192
        %v683 = vunpack.c.0.s8 %v682
        %v684 = vperm.slane %v679, %v683
        %v686 = vpack.i.b16 %v540, %v540
        %v688 = vperm.slane %v686, 0
        %v689 = vunpack.c.l.bf16 %v549
        %v690 = vunpack.c.l.bf16 %v558
        %v691 = vunpack.c.l.bf16 %v567
        %v692 = vunpack.c.l.bf16 %v576
        %v693 = vunpack.c.l.bf16 %v585
        %v694 = vunpack.c.l.bf16 %v594
        %v695 = vunpack.c.l.bf16 %v603
        %v696 = vunpack.c.l.bf16 %v612
        %v697 = vunpack.c.l.bf16 %v621
        %v698 = vunpack.c.l.bf16 %v630
        %v699 = vunpack.c.l.bf16 %v639
        %v700 = vunpack.c.l.bf16 %v648
        %v701 = vunpack.c.l.bf16 %v657
        %v702 = vunpack.c.l.bf16 %v666
        %v703 = vunpack.c.l.bf16 %v675
        %v704 = vunpack.c.l.bf16 %v684
        %v705 = vunpack.c.l.bf16 %v688
        %v706 = vadd.f32 %v689, %v705
        %v707 = vadd.f32 %v690, %v705
        %v708 = vadd.f32 %v691, %v705
        %v709 = vadd.f32 %v692, %v705
        %v710 = vadd.f32 %v693, %v705
        %v711 = vadd.f32 %v694, %v705
        %v712 = vadd.f32 %v695, %v705
        %v713 = vadd.f32 %v696, %v705
        %v714 = vadd.f32 %v697, %v705
        %v715 = vadd.f32 %v698, %v705
        %v716 = vadd.f32 %v699, %v705
        %v717 = vadd.f32 %v700, %v705
        %v718 = vadd.f32 %v701, %v705
        %v719 = vadd.f32 %v702, %v705
        %v720 = vadd.f32 %v703, %v705
        %v721 = vadd.f32 %v704, %v705
        %v722 = vpack.c.bf16 %v706, %v706
        %v723 = vpack.c.bf16 %v707, %v707
        %v724 = vpack.c.bf16 %v708, %v708
        %v725 = vpack.c.bf16 %v709, %v709
        %v726 = vpack.c.bf16 %v710, %v710
        %v727 = vpack.c.bf16 %v711, %v711
        %v728 = vpack.c.bf16 %v712, %v712
        %v729 = vpack.c.bf16 %v713, %v713
        %v730 = vpack.c.bf16 %v714, %v714
        %v731 = vpack.c.bf16 %v715, %v715
        %v732 = vpack.c.bf16 %v716, %v716
        %v733 = vpack.c.bf16 %v717, %v717
        %v734 = vpack.c.bf16 %v718, %v718
        %v735 = vpack.c.bf16 %v719, %v719
        %v736 = vpack.c.bf16 %v720, %v720
        %v737 = vpack.c.bf16 %v721, %v721
        %v738 = vunpack.c.l.bf16 %v722
        %v739 = vunpack.c.l.bf16 %v723
        %v740 = vunpack.c.l.bf16 %v724
        %v741 = vunpack.c.l.bf16 %v725
        %v742 = vunpack.c.l.bf16 %v726
        %v743 = vunpack.c.l.bf16 %v727
        %v744 = vunpack.c.l.bf16 %v728
        %v745 = vunpack.c.l.bf16 %v729
        %v746 = vunpack.c.l.bf16 %v730
        %v747 = vunpack.c.l.bf16 %v731
        %v748 = vunpack.c.l.bf16 %v732
        %v749 = vunpack.c.l.bf16 %v733
        %v750 = vunpack.c.l.bf16 %v734
        %v751 = vunpack.c.l.bf16 %v735
        %v752 = vunpack.c.l.bf16 %v736
        %v753 = vunpack.c.l.bf16 %v737
        %v754 = vmul.f32 %v738, 0.20019531
        %v755 = vmul.f32 %v739, 0.20019531
        %v756 = vmul.f32 %v740, 0.20019531
        %v757 = vmul.f32 %v741, 0.20019531
        %v758 = vmul.f32 %v742, 0.20019531
        %v759 = vmul.f32 %v743, 0.20019531
        %v760 = vmul.f32 %v744, 0.20019531
        %v761 = vmul.f32 %v745, 0.20019531
        %v762 = vmul.f32 %v746, 0.20019531
        %v763 = vmul.f32 %v747, 0.20019531
        %v764 = vmul.f32 %v748, 0.20019531
        %v765 = vmul.f32 %v749, 0.20019531
        %v766 = vmul.f32 %v750, 0.20019531
        %v767 = vmul.f32 %v751, 0.20019531
        %v768 = vmul.f32 %v752, 0.20019531
        %v769 = vmul.f32 %v753, 0.20019531
        %v770 = vpack.c.bf16 %v754, %v754
        %v771 = vpack.c.bf16 %v755, %v755
        %v772 = vpack.c.bf16 %v756, %v756
        %v773 = vpack.c.bf16 %v757, %v757
        %v774 = vpack.c.bf16 %v758, %v758
        %v775 = vpack.c.bf16 %v759, %v759
        %v776 = vpack.c.bf16 %v760, %v760
        %v777 = vpack.c.bf16 %v761, %v761
        %v778 = vpack.c.bf16 %v762, %v762
        %v779 = vpack.c.bf16 %v763, %v763
        %v780 = vpack.c.bf16 %v764, %v764
        %v781 = vpack.c.bf16 %v765, %v765
        %v782 = vpack.c.bf16 %v766, %v766
        %v783 = vpack.c.bf16 %v767, %v767
        %v784 = vpack.c.bf16 %v768, %v768
        %v785 = vpack.c.bf16 %v769, %v769
        %v786 = vunpack.c.l.bf16 %v770
        %v787 = vunpack.c.l.bf16 %v771
        %v788 = vunpack.c.l.bf16 %v772
        %v789 = vunpack.c.l.bf16 %v773
        %v790 = vunpack.c.l.bf16 %v774
        %v791 = vunpack.c.l.bf16 %v775
        %v792 = vunpack.c.l.bf16 %v776
        %v793 = vunpack.c.l.bf16 %v777
        %v794 = vunpack.c.l.bf16 %v778
        %v795 = vunpack.c.l.bf16 %v779
        %v796 = vunpack.c.l.bf16 %v780
        %v797 = vunpack.c.l.bf16 %v781
        %v798 = vunpack.c.l.bf16 %v782
        %v799 = vunpack.c.l.bf16 %v783
        %v800 = vunpack.c.l.bf16 %v784
        %v801 = vunpack.c.l.bf16 %v785
        %v802 = vmax.f32 %v738, %v786
        %v803 = vmax.f32 %v739, %v787
        %v804 = vmax.f32 %v740, %v788
        %v805 = vmax.f32 %v741, %v789
        %v806 = vmax.f32 %v742, %v790
        %v807 = vmax.f32 %v743, %v791
        %v808 = vmax.f32 %v744, %v792
        %v809 = vmax.f32 %v745, %v793
        %v810 = vmax.f32 %v746, %v794
        %v811 = vmax.f32 %v747, %v795
        %v812 = vmax.f32 %v748, %v796
        %v813 = vmax.f32 %v749, %v797
        %v814 = vmax.f32 %v750, %v798
        %v815 = vmax.f32 %v751, %v799
        %v816 = vmax.f32 %v752, %v800
        %v817 = vmax.f32 %v753, %v801
        %v818 = vpack.c.bf16 %v802, %v802
        %v819 = vpack.c.bf16 %v803, %v803
        %v820 = vpack.c.bf16 %v804, %v804
        %v821 = vpack.c.bf16 %v805, %v805
        %v822 = vpack.c.bf16 %v806, %v806
        %v823 = vpack.c.bf16 %v807, %v807
        %v824 = vpack.c.bf16 %v808, %v808
        %v825 = vpack.c.bf16 %v809, %v809
        %v826 = vpack.c.bf16 %v810, %v810
        %v827 = vpack.c.bf16 %v811, %v811
        %v828 = vpack.c.bf16 %v812, %v812
        %v829 = vpack.c.bf16 %v813, %v813
        %v830 = vpack.c.bf16 %v814, %v814
        %v831 = vpack.c.bf16 %v815, %v815
        %v832 = vpack.c.bf16 %v816, %v816
        %v833 = vpack.c.bf16 %v817, %v817
        %s834 = smul.addr %s520, 4
        %s835 = scalar_lea.vmem [#allocation8], %s834
        %v836 = vld [vmem:[%s835] sm:$0xf]
        %v837 = vld [vmem:[%s835 + $0x4] sm:$0xf]
        %v838 = vld [vmem:[%s835 + $0x8] sm:$0xf]
        %v839 = vld [vmem:[%s835 + $0xc] sm:$0xf]
        %v840 = vld [vmem:[%s835 + $0x10] sm:$0xf]
        %v841 = vld [vmem:[%s835 + $0x14] sm:$0xf]
        %v842 = vld [vmem:[%s835 + $0x18] sm:$0xf]
        %v843 = vld [vmem:[%s835 + $0x1c] sm:$0xf]
        %v844 = vld [vmem:[%s835 + $0x20] sm:$0xf]
        %v845 = vld [vmem:[%s835 + $0x24] sm:$0xf]
        %v846 = vld [vmem:[%s835 + $0x28] sm:$0xf]
        %v847 = vld [vmem:[%s835 + $0x2c] sm:$0xf]
        %v848 = vld [vmem:[%s835 + $0x30] sm:$0xf]
        %v849 = vld [vmem:[%s835 + $0x34] sm:$0xf]
        %v850 = vld [vmem:[%s835 + $0x38] sm:$0xf]
        %v851 = vld [vmem:[%s835 + $0x3c] sm:$0xf]
        %v852 = vunpack.c.l.bf16 %v818
        %v853 = vunpack.c.l.bf16 %v819
        %v854 = vunpack.c.l.bf16 %v820
        %v855 = vunpack.c.l.bf16 %v821
        %v856 = vunpack.c.l.bf16 %v822
        %v857 = vunpack.c.l.bf16 %v823
        %v858 = vunpack.c.l.bf16 %v824
        %v859 = vunpack.c.l.bf16 %v825
        %v860 = vunpack.c.l.bf16 %v826
        %v861 = vunpack.c.l.bf16 %v827
        %v862 = vunpack.c.l.bf16 %v828
        %v863 = vunpack.c.l.bf16 %v829
        %v864 = vunpack.c.l.bf16 %v830
        %v865 = vunpack.c.l.bf16 %v831
        %v866 = vunpack.c.l.bf16 %v832
        %v867 = vunpack.c.l.bf16 %v833
        %v868 = vunpack.c.l.bf16 %v836
        %v869 = vunpack.c.l.bf16 %v837
        %v870 = vunpack.c.l.bf16 %v838
        %v871 = vunpack.c.l.bf16 %v839
        %v872 = vunpack.c.l.bf16 %v840
        %v873 = vunpack.c.l.bf16 %v841
        %v874 = vunpack.c.l.bf16 %v842
        %v875 = vunpack.c.l.bf16 %v843
        %v876 = vunpack.c.l.bf16 %v844
        %v877 = vunpack.c.l.bf16 %v845
        %v878 = vunpack.c.l.bf16 %v846
        %v879 = vunpack.c.l.bf16 %v847
        %v880 = vunpack.c.l.bf16 %v848
        %v881 = vunpack.c.l.bf16 %v849
        %v882 = vunpack.c.l.bf16 %v850
        %v883 = vunpack.c.l.bf16 %v851
        %v884 = vadd.f32 %v852, %v868
        %v885 = vadd.f32 %v853, %v869
        %v886 = vadd.f32 %v854, %v870
        %v887 = vadd.f32 %v855, %v871
        %v888 = vadd.f32 %v856, %v872
        %v889 = vadd.f32 %v857, %v873
        %v890 = vadd.f32 %v858, %v874
        %v891 = vadd.f32 %v859, %v875
        %v892 = vadd.f32 %v860, %v876
        %v893 = vadd.f32 %v861, %v877
        %v894 = vadd.f32 %v862, %v878
        %v895 = vadd.f32 %v863, %v879
        %v896 = vadd.f32 %v864, %v880
        %v897 = vadd.f32 %v865, %v881
        %v898 = vadd.f32 %v866, %v882
        %v899 = vadd.f32 %v867, %v883
        %v900 = vpack.c.bf16 %v884, %v884
        %v901 = vpack.c.bf16 %v885, %v885
        %v902 = vpack.c.bf16 %v886, %v886
        %v903 = vpack.c.bf16 %v887, %v887
        %v904 = vpack.c.bf16 %v888, %v888
        %v905 = vpack.c.bf16 %v889, %v889
        %v906 = vpack.c.bf16 %v890, %v890
        %v907 = vpack.c.bf16 %v891, %v891
        %v908 = vpack.c.bf16 %v892, %v892
        %v909 = vpack.c.bf16 %v893, %v893
        %v910 = vpack.c.bf16 %v894, %v894
        %v911 = vpack.c.bf16 %v895, %v895
        %v912 = vpack.c.bf16 %v896, %v896
        %v913 = vpack.c.bf16 %v897, %v897
        %v914 = vpack.c.bf16 %v898, %v898
        %v915 = vpack.c.bf16 %v899, %v899
        %v916 = vunpack.c.l.bf16 %v900
        %v917 = vunpack.c.l.bf16 %v901
        %v918 = vunpack.c.l.bf16 %v902
        %v919 = vunpack.c.l.bf16 %v903
        %v920 = vunpack.c.l.bf16 %v904
        %v921 = vunpack.c.l.bf16 %v905
        %v922 = vunpack.c.l.bf16 %v906
        %v923 = vunpack.c.l.bf16 %v907
        %v924 = vunpack.c.l.bf16 %v908
        %v925 = vunpack.c.l.bf16 %v909
        %v926 = vunpack.c.l.bf16 %v910
        %v927 = vunpack.c.l.bf16 %v911
        %v928 = vunpack.c.l.bf16 %v912
        %v929 = vunpack.c.l.bf16 %v913
        %v930 = vunpack.c.l.bf16 %v914
        %v931 = vunpack.c.l.bf16 %v915
        %932 = vmax.xlane.f32.xlu0 %v916
        %v933 = vpop.xlane.xlu0 %932
        %934 = vmax.xlane.f32.xlu0 %v917
        %v935 = vpop.xlane.xlu0 %934
        %936 = vmax.xlane.f32.xlu0 %v918
        %v937 = vpop.xlane.xlu0 %936
        %938 = vmax.xlane.f32.xlu0 %v919
        %v939 = vpop.xlane.xlu0 %938
        %940 = vmax.xlane.f32.xlu0 %v920
        %v941 = vpop.xlane.xlu0 %940
        %942 = vmax.xlane.f32.xlu0 %v921
        %v943 = vpop.xlane.xlu0 %942
        %944 = vmax.xlane.f32.xlu0 %v922
        %v945 = vpop.xlane.xlu0 %944
        %946 = vmax.xlane.f32.xlu0 %v923
        %v947 = vpop.xlane.xlu0 %946
        %948 = vmax.xlane.f32.xlu0 %v924
        %v949 = vpop.xlane.xlu0 %948
        %950 = vmax.xlane.f32.xlu0 %v925
        %v951 = vpop.xlane.xlu0 %950
        %952 = vmax.xlane.f32.xlu0 %v926
        %v953 = vpop.xlane.xlu0 %952
        %954 = vmax.xlane.f32.xlu0 %v927
        %v955 = vpop.xlane.xlu0 %954
        %956 = vmax.xlane.f32.xlu0 %v928
        %v957 = vpop.xlane.xlu0 %956
        %958 = vmax.xlane.f32.xlu0 %v929
        %v959 = vpop.xlane.xlu0 %958
        %960 = vmax.xlane.f32.xlu0 %v930
        %v961 = vpop.xlane.xlu0 %960
        %962 = vmax.xlane.f32.xlu0 %v931
        %v963 = vpop.xlane.xlu0 %962
        %v964 = vpack.c.bf16 %v933, %v933
        %v965 = vpack.c.bf16 %v935, %v935
        %v966 = vpack.c.bf16 %v937, %v937
        %v967 = vpack.c.bf16 %v939, %v939
        %v968 = vpack.c.bf16 %v941, %v941
        %v969 = vpack.c.bf16 %v943, %v943
        %v970 = vpack.c.bf16 %v945, %v945
        %v971 = vpack.c.bf16 %v947, %v947
        %v972 = vpack.c.bf16 %v949, %v949
        %v973 = vpack.c.bf16 %v951, %v951
        %v974 = vpack.c.bf16 %v953, %v953
        %v975 = vpack.c.bf16 %v955, %v955
        %v976 = vpack.c.bf16 %v957, %v957
        %v977 = vpack.c.bf16 %v959, %v959
        %v978 = vpack.c.bf16 %v961, %v961
        %v979 = vpack.c.bf16 %v963, %v963
        %v980 = vunpack.c.l.bf16 %v964
        %v981 = vunpack.c.l.bf16 %v965
        %v982 = vunpack.c.l.bf16 %v966
        %v983 = vunpack.c.l.bf16 %v967
        %v984 = vunpack.c.l.bf16 %v968
        %v985 = vunpack.c.l.bf16 %v969
        %v986 = vunpack.c.l.bf16 %v970
        %v987 = vunpack.c.l.bf16 %v971
        %v988 = vunpack.c.l.bf16 %v972
        %v989 = vunpack.c.l.bf16 %v973
        %v990 = vunpack.c.l.bf16 %v974
        %v991 = vunpack.c.l.bf16 %v975
        %v992 = vunpack.c.l.bf16 %v976
        %v993 = vunpack.c.l.bf16 %v977
        %v994 = vunpack.c.l.bf16 %v978
        %v995 = vunpack.c.l.bf16 %v979
        %v996 = vsub.f32 %v916, %v980
        %v997 = vsub.f32 %v917, %v981
        %v998 = vsub.f32 %v918, %v982
        %v999 = vsub.f32 %v919, %v983
        %v1000 = vsub.f32 %v920, %v984
        %v1001 = vsub.f32 %v921, %v985
        %v1002 = vsub.f32 %v922, %v986
        %v1003 = vsub.f32 %v923, %v987
        %v1004 = vsub.f32 %v924, %v988
        %v1005 = vsub.f32 %v925, %v989
        %v1006 = vsub.f32 %v926, %v990
        %v1007 = vsub.f32 %v927, %v991
        %v1008 = vsub.f32 %v928, %v992
        %v1009 = vsub.f32 %v929, %v993
        %v1010 = vsub.f32 %v930, %v994
        %v1011 = vsub.f32 %v931, %v995
        %v1012 = vpack.c.bf16 %v997, %v996
        %v1013 = vpack.c.bf16 %v999, %v998
        %v1014 = vpack.c.bf16 %v1001, %v1000
        %v1015 = vpack.c.bf16 %v1003, %v1002
        %v1016 = vpack.c.bf16 %v1005, %v1004
        %v1017 = vpack.c.bf16 %v1007, %v1006
        %v1018 = vpack.c.bf16 %v1009, %v1008
        %v1019 = vpack.c.bf16 %v1011, %v1010
        %v1020 = vunpack.c.l.bf16 %v1012
        %v1021 = vunpack.c.h.bf16 %v1012
        %v1022 = vunpack.c.l.bf16 %v1013
        %v1023 = vunpack.c.h.bf16 %v1013
        %v1024 = vunpack.c.l.bf16 %v1014
        %v1025 = vunpack.c.h.bf16 %v1014
        %v1026 = vunpack.c.l.bf16 %v1015
        %v1027 = vunpack.c.h.bf16 %v1015
        %v1028 = vunpack.c.l.bf16 %v1016
        %v1029 = vunpack.c.h.bf16 %v1016
        %v1030 = vunpack.c.l.bf16 %v1017
        %v1031 = vunpack.c.h.bf16 %v1017
        %v1032 = vunpack.c.l.bf16 %v1018
        %v1033 = vunpack.c.h.bf16 %v1018
        %v1034 = vunpack.c.l.bf16 %v1019
        %v1035 = vunpack.c.h.bf16 %v1019
        %v1036 = vmul.f32 %v1020, 1.442695
        %v1037 = vpow.pop %v1036
        %v1038 = vmul.f32 %v1021, 1.442695
        %v1039 = vpow.pop %v1038
        %v1040 = vmul.f32 %v1022, 1.442695
        %v1041 = vpow.pop %v1040
        %v1042 = vmul.f32 %v1023, 1.442695
        %v1043 = vpow.pop %v1042
        %v1044 = vmul.f32 %v1024, 1.442695
        %v1045 = vpow.pop %v1044
        %v1046 = vmul.f32 %v1025, 1.442695
        %v1047 = vpow.pop %v1046
        %v1048 = vmul.f32 %v1026, 1.442695
        %v1049 = vpow.pop %v1048
        %v1050 = vmul.f32 %v1027, 1.442695
        %v1051 = vpow.pop %v1050
        %v1052 = vmul.f32 %v1028, 1.442695
        %v1053 = vpow.pop %v1052
        %v1054 = vmul.f32 %v1029, 1.442695
        %v1055 = vpow.pop %v1054
        %v1056 = vmul.f32 %v1030, 1.442695
        %v1057 = vpow.pop %v1056
        %v1058 = vmul.f32 %v1031, 1.442695
        %v1059 = vpow.pop %v1058
        %v1060 = vmul.f32 %v1032, 1.442695
        %v1061 = vpow.pop %v1060
        %v1062 = vmul.f32 %v1033, 1.442695
        %v1063 = vpow.pop %v1062
        %v1064 = vmul.f32 %v1034, 1.442695
        %v1065 = vpow.pop %v1064
        %v1066 = vmul.f32 %v1035, 1.442695
        %v1067 = vpow.pop %v1066
        %v1068 = vpack.c.bf16 %v1039, %v1037
        %v1069 = vpack.c.bf16 %v1043, %v1041
        %v1070 = vpack.c.bf16 %v1047, %v1045
        %v1071 = vpack.c.bf16 %v1051, %v1049
        %v1072 = vpack.c.bf16 %v1055, %v1053
        %v1073 = vpack.c.bf16 %v1059, %v1057
        %v1074 = vpack.c.bf16 %v1063, %v1061
        %v1075 = vpack.c.bf16 %v1067, %v1065
        %v1076 = vunpack.c.l.bf16 %v1068
        %v1077 = vunpack.c.h.bf16 %v1068
        %v1078 = vunpack.c.l.bf16 %v1069
        %v1079 = vunpack.c.h.bf16 %v1069
        %v1080 = vunpack.c.l.bf16 %v1070
        %v1081 = vunpack.c.h.bf16 %v1070
        %v1082 = vunpack.c.l.bf16 %v1071
        %v1083 = vunpack.c.h.bf16 %v1071
        %v1084 = vunpack.c.l.bf16 %v1072
        %v1085 = vunpack.c.h.bf16 %v1072
        %v1086 = vunpack.c.l.bf16 %v1073
        %v1087 = vunpack.c.h.bf16 %v1073
        %v1088 = vunpack.c.l.bf16 %v1074
        %v1089 = vunpack.c.h.bf16 %v1074
        %v1090 = vunpack.c.l.bf16 %v1075
        %v1091 = vunpack.c.h.bf16 %v1075
        %1092 = vadd.xlane.f32.xlu0 %v1076
        %v1093 = vpop.xlane.xlu0 %1092
        %1094 = vadd.xlane.f32.xlu0 %v1077
        %v1095 = vpop.xlane.xlu0 %1094
        %1096 = vadd.xlane.f32.xlu0 %v1078
        %v1097 = vpop.xlane.xlu0 %1096
        %1098 = vadd.xlane.f32.xlu0 %v1079
        %v1099 = vpop.xlane.xlu0 %1098
        %1100 = vadd.xlane.f32.xlu0 %v1080
        %v1101 = vpop.xlane.xlu0 %1100
        %1102 = vadd.xlane.f32.xlu0 %v1081
        %v1103 = vpop.xlane.xlu0 %1102
        %1104 = vadd.xlane.f32.xlu0 %v1082
        %v1105 = vpop.xlane.xlu0 %1104
        %1106 = vadd.xlane.f32.xlu0 %v1083
        %v1107 = vpop.xlane.xlu0 %1106
        %1108 = vadd.xlane.f32.xlu0 %v1084
        %v1109 = vpop.xlane.xlu0 %1108
        %1110 = vadd.xlane.f32.xlu0 %v1085
        %v1111 = vpop.xlane.xlu0 %1110
        %1112 = vadd.xlane.f32.xlu0 %v1086
        %v1113 = vpop.xlane.xlu0 %1112
        %1114 = vadd.xlane.f32.xlu0 %v1087
        %v1115 = vpop.xlane.xlu0 %1114
        %1116 = vadd.xlane.f32.xlu0 %v1088
        %v1117 = vpop.xlane.xlu0 %1116
        %1118 = vadd.xlane.f32.xlu0 %v1089
        %v1119 = vpop.xlane.xlu0 %1118
        %1120 = vadd.xlane.f32.xlu0 %v1090
        %v1121 = vpop.xlane.xlu0 %1120
        %1122 = vadd.xlane.f32.xlu0 %v1091
        %v1123 = vpop.xlane.xlu0 %1122
        %v1124 = vld [vmem:[#allocation3] sm:$0xf]
        %v1125 = vld [vmem:[#allocation3 + $0x4] sm:$0xf]
        %v1126 = vld [vmem:[#allocation3 + $0x8] sm:$0xf]
        %v1127 = vld [vmem:[#allocation3 + $0xc] sm:$0xf]
        %v1128 = vld [vmem:[#allocation3 + $0x10] sm:$0xf]
        %v1129 = vld [vmem:[#allocation3 + $0x14] sm:$0xf]
        %v1130 = vld [vmem:[#allocation3 + $0x18] sm:$0xf]
        %v1131 = vld [vmem:[#allocation3 + $0x1c] sm:$0xf]
        %v1132 = vld [vmem:[#allocation3 + $0x20] sm:$0xf]
        %v1133 = vld [vmem:[#allocation3 + $0x24] sm:$0xf]
        %v1134 = vld [vmem:[#allocation3 + $0x28] sm:$0xf]
        %v1135 = vld [vmem:[#allocation3 + $0x2c] sm:$0xf]
        %v1136 = vld [vmem:[#allocation3 + $0x30] sm:$0xf]
        %v1137 = vld [vmem:[#allocation3 + $0x34] sm:$0xf]
        %v1138 = vld [vmem:[#allocation3 + $0x38] sm:$0xf]
        %v1139 = vld [vmem:[#allocation3 + $0x3c] sm:$0xf]
        %v1156 = vunpack.c.l.b16 %v1124
        %v1157 = vunpack.c.l.b16 %v1125
        %v1158 = vunpack.c.l.b16 %v1126
        %v1159 = vunpack.c.l.b16 %v1127
        %v1160 = vunpack.c.l.b16 %v1128
        %v1161 = vunpack.c.l.b16 %v1129
        %v1162 = vunpack.c.l.b16 %v1130
        %v1163 = vunpack.c.l.b16 %v1131
        %v1164 = vunpack.c.l.b16 %v1132
        %v1165 = vunpack.c.l.b16 %v1133
        %v1166 = vunpack.c.l.b16 %v1134
        %v1167 = vunpack.c.l.b16 %v1135
        %v1168 = vunpack.c.l.b16 %v1136
        %v1169 = vunpack.c.l.b16 %v1137
        %v1170 = vunpack.c.l.b16 %v1138
        %v1171 = vunpack.c.l.b16 %v1139
        %v1172 = vpack.c.b16 %v1157, %v1156
        %v1173 = vpack.c.b16 %v1159, %v1158
        %v1174 = vpack.c.b16 %v1161, %v1160
        %v1175 = vpack.c.b16 %v1163, %v1162
        %v1176 = vpack.c.b16 %v1165, %v1164
        %v1177 = vpack.c.b16 %v1167, %v1166
        %v1178 = vpack.c.b16 %v1169, %v1168
        %v1179 = vpack.c.b16 %v1171, %v1170
        %1188 = vmatpush.bf16.msra.mxu0 %v1179
        %1189 = vmatpush.bf16.msra.mxu0 %v1178
        %1190 = vmatpush.bf16.msra.mxu0 %v1177
        %1191 = vmatpush.bf16.msra.mxu0 %v1176
        %1192 = vmatpush.bf16.msra.mxu0 %v1175
        %1193 = vmatpush.bf16.msra.mxu0 %v1174
        %1194 = vmatpush.bf16.msra.mxu0 %v1173
        %1195 = vmatpush.bf16.msra.mxu0 %v1172
        %1196 = vmatmul.bf16.gmra.mxu0 %v1068
        %v1197 = vpop.f32.mrf.mxu0
        %v1198 = vadd.f32 0.0, %v1197
        %v1199 = vpop.f32.mrf.mxu0
        %v1200 = vadd.f32 0.0, %v1199
        %1201 = vmatmul.bf16.gmra.mxu0 %v1069
        %v1202 = vpop.f32.mrf.mxu0
        %v1203 = vadd.f32 0.0, %v1202
        %v1204 = vpop.f32.mrf.mxu0
        %v1205 = vadd.f32 0.0, %v1204
        %1206 = vmatmul.bf16.gmra.mxu0 %v1070
        %v1207 = vpop.f32.mrf.mxu0
        %v1208 = vadd.f32 0.0, %v1207
        %v1209 = vpop.f32.mrf.mxu0
        %v1210 = vadd.f32 0.0, %v1209
        %1211 = vmatmul.bf16.gmra.mxu0 %v1071
        %v1212 = vpop.f32.mrf.mxu0
        %v1213 = vadd.f32 0.0, %v1212
        %v1214 = vpop.f32.mrf.mxu0
        %v1215 = vadd.f32 0.0, %v1214
        %1216 = vmatmul.bf16.gmra.mxu0 %v1072
        %v1217 = vpop.f32.mrf.mxu0
        %v1218 = vadd.f32 0.0, %v1217
        %v1219 = vpop.f32.mrf.mxu0
        %v1220 = vadd.f32 0.0, %v1219
        %1221 = vmatmul.bf16.gmra.mxu0 %v1073
        %v1222 = vpop.f32.mrf.mxu0
        %v1223 = vadd.f32 0.0, %v1222
        %v1224 = vpop.f32.mrf.mxu0
        %v1225 = vadd.f32 0.0, %v1224
        %1226 = vmatmul.bf16.gmra.mxu0 %v1074
        %v1227 = vpop.f32.mrf.mxu0
        %v1228 = vadd.f32 0.0, %v1227
        %v1229 = vpop.f32.mrf.mxu0
        %v1230 = vadd.f32 0.0, %v1229
        %1231 = vmatmul.bf16.gmra.mxu0 %v1075
        %v1232 = vpop.f32.mrf.mxu0
        %v1233 = vadd.f32 0.0, %v1232
        %v1234 = vpop.f32.mrf.mxu0
        %v1235 = vadd.f32 0.0, %v1234
        %1236 = vdwg.mxu0
        %v1237 = vrcp.pop %v1093
        %v1238 = vrcp.pop %v1095
        %v1239 = vrcp.pop %v1097
        %v1240 = vrcp.pop %v1099
        %v1241 = vrcp.pop %v1101
        %v1242 = vrcp.pop %v1103
        %v1243 = vrcp.pop %v1105
        %v1244 = vrcp.pop %v1107
        %v1245 = vrcp.pop %v1109
        %v1246 = vrcp.pop %v1111
        %v1247 = vrcp.pop %v1113
        %v1248 = vrcp.pop %v1115
        %v1249 = vrcp.pop %v1117
        %v1250 = vrcp.pop %v1119
        %v1251 = vrcp.pop %v1121
        %v1252 = vrcp.pop %v1123
        %v1253 = vmul.f32 %v1198, %v1237
        %v1254 = vmul.f32 %v1200, %v1238
        %v1255 = vmul.f32 %v1203, %v1239
        %v1256 = vmul.f32 %v1205, %v1240
        %v1257 = vmul.f32 %v1208, %v1241
        %v1258 = vmul.f32 %v1210, %v1242
        %v1259 = vmul.f32 %v1213, %v1243
        %v1260 = vmul.f32 %v1215, %v1244
        %v1261 = vmul.f32 %v1218, %v1245
        %v1262 = vmul.f32 %v1220, %v1246
        %v1263 = vmul.f32 %v1223, %v1247
        %v1264 = vmul.f32 %v1225, %v1248
        %v1265 = vmul.f32 %v1228, %v1249
        %v1266 = vmul.f32 %v1230, %v1250
        %v1267 = vmul.f32 %v1233, %v1251
        %v1268 = vmul.f32 %v1235, %v1252
        %v1269 = vld [vmem:[%s263] sm:$0x1]
        %v1271 = vperm.slane %v1269, 0
        %v1273 = vadd.f32 %v1253, %v1271
        %v1274 = vadd.f32 %v1254, %v1271
        %v1275 = vadd.f32 %v1255, %v1271
        %v1276 = vadd.f32 %v1256, %v1271
        %v1277 = vadd.f32 %v1257, %v1271
        %v1278 = vadd.f32 %v1258, %v1271
        %v1279 = vadd.f32 %v1259, %v1271
        %v1280 = vadd.f32 %v1260, %v1271
        %v1281 = vadd.f32 %v1261, %v1271
        %v1282 = vadd.f32 %v1262, %v1271
        %v1283 = vadd.f32 %v1263, %v1271
        %v1284 = vadd.f32 %v1264, %v1271
        %v1285 = vadd.f32 %v1265, %v1271
        %v1286 = vadd.f32 %v1266, %v1271
        %v1287 = vadd.f32 %v1267, %v1271
        %v1288 = vadd.f32 %v1268, %v1271
        %p1289 = scmp.lt.s32.totalorder %s25, 1
        // Predicated region
        $region58: #{tpu_custom_call.1} parent=35 // pred_check
          %p1290 = pneg %p1289
        $region59: #{tpu_custom_call.1} parent=35 // pred_check_branch
          %1292 = sbr.rel (%p1290) target = $region61
        $region60: #{tpu_custom_call.1} parent=35 // pred_region
          %v1293 = vmax.f32 %v1273, 0.0
          %v1294 = vmax.f32 %v1274, 0.0
          %v1295 = vmax.f32 %v1275, 0.0
          %v1296 = vmax.f32 %v1276, 0.0
          %v1297 = vmax.f32 %v1277, 0.0
          %v1298 = vmax.f32 %v1278, 0.0
          %v1299 = vmax.f32 %v1279, 0.0
          %v1300 = vmax.f32 %v1280, 0.0
          %v1301 = vmax.f32 %v1281, 0.0
          %v1302 = vmax.f32 %v1282, 0.0
          %v1303 = vmax.f32 %v1283, 0.0
          %v1304 = vmax.f32 %v1284, 0.0
          %v1305 = vmax.f32 %v1285, 0.0
          %v1306 = vmax.f32 %v1286, 0.0
          %v1307 = vmax.f32 %v1287, 0.0
          %v1308 = vmax.f32 %v1288, 0.0
          %v1309 = vpack.c.bf16 %v1293, %v1293
          %v1310 = vpack.c.bf16 %v1294, %v1294
          %v1311 = vpack.c.bf16 %v1295, %v1295
          %v1312 = vpack.c.bf16 %v1296, %v1296
          %v1313 = vpack.c.bf16 %v1297, %v1297
          %v1314 = vpack.c.bf16 %v1298, %v1298
          %v1315 = vpack.c.bf16 %v1299, %v1299
          %v1316 = vpack.c.bf16 %v1300, %v1300
          %v1317 = vpack.c.bf16 %v1301, %v1301
          %v1318 = vpack.c.bf16 %v1302, %v1302
          %v1319 = vpack.c.bf16 %v1303, %v1303
          %v1320 = vpack.c.bf16 %v1304, %v1304
          %v1321 = vpack.c.bf16 %v1305, %v1305
          %v1322 = vpack.c.bf16 %v1306, %v1306
          %v1323 = vpack.c.bf16 %v1307, %v1307
          %v1324 = vpack.c.bf16 %v1308, %v1308
          %s1325 = smul.addr %s520, 4
          %s1326 = scalar_lea.vmem [#allocation2], %s1325
          %1327 = vst [vmem:[%s1326] sm:$0xf] %v1309
          %1328 = vst [vmem:[%s1326 + $0x4] sm:$0xf] %v1310
          %1329 = vst [vmem:[%s1326 + $0x8] sm:$0xf] %v1311
          %1330 = vst [vmem:[%s1326 + $0xc] sm:$0xf] %v1312
          %1331 = vst [vmem:[%s1326 + $0x10] sm:$0xf] %v1313
          %1332 = vst [vmem:[%s1326 + $0x14] sm:$0xf] %v1314
          %1333 = vst [vmem:[%s1326 + $0x18] sm:$0xf] %v1315
          %1334 = vst [vmem:[%s1326 + $0x1c] sm:$0xf] %v1316
          %1335 = vst [vmem:[%s1326 + $0x20] sm:$0xf] %v1317
          %1336 = vst [vmem:[%s1326 + $0x24] sm:$0xf] %v1318
          %1337 = vst [vmem:[%s1326 + $0x28] sm:$0xf] %v1319
          %1338 = vst [vmem:[%s1326 + $0x2c] sm:$0xf] %v1320
          %1339 = vst [vmem:[%s1326 + $0x30] sm:$0xf] %v1321
          %1340 = vst [vmem:[%s1326 + $0x34] sm:$0xf] %v1322
          %1341 = vst [vmem:[%s1326 + $0x38] sm:$0xf] %v1323
          %1342 = vst [vmem:[%s1326 + $0x3c] sm:$0xf] %v1324
        $region61: #{tpu_custom_call.1} parent=35 // pred_fallthru
          _
        %p1343 = scmp.eq.s32.totalorder %s25, 1
        // Predicated region
        $region62: #{tpu_custom_call.1} parent=35 // pred_check
          %p1344 = pneg %p1343
        $region63: #{tpu_custom_call.1} parent=35 // pred_check_branch
          %1346 = sbr.rel (%p1344) target = $region65
        $region64: #{tpu_custom_call.1} parent=35 // pred_region
          %s1347 = scalar_lea.vmem [#allocation10], %s519
          %1348 = vst [vmem:[%s1347] sm:$0xff] %v1273
          %1349 = vst [vmem:[%s1347 + $0x8] sm:$0xff] %v1274
          %1350 = vst [vmem:[%s1347 + $0x10] sm:$0xff] %v1275
          %1351 = vst [vmem:[%s1347 + $0x18] sm:$0xff] %v1276
          %1352 = vst [vmem:[%s1347 + $0x20] sm:$0xff] %v1277
          %1353 = vst [vmem:[%s1347 + $0x28] sm:$0xff] %v1278
          %1354 = vst [vmem:[%s1347 + $0x30] sm:$0xff] %v1279
          %1355 = vst [vmem:[%s1347 + $0x38] sm:$0xff] %v1280
          %1356 = vst [vmem:[%s1347 + $0x40] sm:$0xff] %v1281
          %1357 = vst [vmem:[%s1347 + $0x48] sm:$0xff] %v1282
          %1358 = vst [vmem:[%s1347 + $0x50] sm:$0xff] %v1283
          %1359 = vst [vmem:[%s1347 + $0x58] sm:$0xff] %v1284
          %1360 = vst [vmem:[%s1347 + $0x60] sm:$0xff] %v1285
          %1361 = vst [vmem:[%s1347 + $0x68] sm:$0xff] %v1286
          %1362 = vst [vmem:[%s1347 + $0x70] sm:$0xff] %v1287
          %1363 = vst [vmem:[%s1347 + $0x78] sm:$0xff] %v1288
        $region65: #{tpu_custom_call.1} parent=35 // pred_fallthru
          _
        // Predicated region
        $region66: #{tpu_custom_call.1} parent=35 // pred_check
          %p1364 = pneg %p145
        $region67: #{tpu_custom_call.1} parent=35 // pred_check_branch
          %1366 = sbr.rel (%p1364) target = $region69
        $region68: #{tpu_custom_call.1} parent=35 // pred_region
          %1368 = vsyncadd [#allocation7], 0
          %s1369 = sshll.u32 [#allocation10], 4
          %s1370 = int_to_ptr.vmem [resolvable:$true] %s1369
          %s1371 = sshll.u32 %s5, 4
          %s1372 = int_to_ptr.hbm [resolvable:$true] %s1371
          %1377 = dma.vmem_to_hbm [thread:$0]  %s1370, 2048, %s1372, [#allocation7], 128, 128, 8
        $region69: #{tpu_custom_call.1} parent=35 // pred_fallthru
          _
        // Predicated region
        $region70: #{tpu_custom_call.1} parent=35 // pred_check
          %p1378 = pneg %p145
        $region71: #{tpu_custom_call.1} parent=35 // pred_check_branch
          %1380 = sbr.rel (%p1378) target = $region73
        $region72: #{tpu_custom_call.1} parent=35 // pred_region
          %1382 = dma.done [#allocation7], 2048
        $region73: #{tpu_custom_call.1} parent=35 // pred_fallthru
          _
      $region36: #{tpu_custom_call.1} parent=5 // pred_fallthru
        _
      %p1383 = scmp.le.s32.totalorder 2, %s16
      // Predicated region
      $region74: #{tpu_custom_call.1} parent=5 // pred_check
        %p1384 = pneg %p1383
      $region75: #{tpu_custom_call.1} parent=5 // pred_check_branch
        %1386 = sbr.rel (%p1384) target = $region77
      $region76: #{tpu_custom_call.1} parent=5 // pred_region
        %s1387 = ssub.s32 %s16, 2
      $region77: #{tpu_custom_call.1} parent=5 // pred_fallthru
        _
    $region6: #{tpu_custom_call.1} parent=1 // loop_footer
      %s20 = sadd.s32 1, %s16
    $region7: #{tpu_custom_call.1} parent=1 // loop_footer_branch
      %15 = sbr.rel target = $region3
    $region8: #{tpu_custom_call.1} parent=1 // loop_exit
      _
    %1388 = vsyncpa [#allocation6], 1
    %s1389 = scalar_lea.sflag [#allocation6], 1
    %1390 = vsyncpa %s1389, 1
    %1391 = vsyncpa [#allocation9], 1
    %1392 = vsyncpa [#allocation7], 1
    %s1393 = scalar_lea.sflag [#allocation7], 1
    %1394 = vsyncpa %s1393, 1

</llo_original>
